<compile_context>
chip_gen: v7x
topology: tpu7x:2x2x1
jax: 0.10.0
libtpu: 0.0.40
codegen_flags: <defaults>
</compile_context>

<pallas_src>
import functools

import jax
import jax.numpy as jnp
from jax.experimental import pallas as pl
from jax.experimental.pallas import tpu as pltpu


# ---------------------------------------------------------------------------
# Kernel
# ---------------------------------------------------------------------------

def _layernorm(x, gamma, beta, eps=1e-5):
    # torch.nn.LayerNorm: biased variance, eps=1e-5, f32 math.
    mu = jnp.mean(x, axis=-1, keepdims=True)
    var = jnp.mean((x - mu) ** 2, axis=-1, keepdims=True)
    return (x - mu) * jax.lax.rsqrt(var + eps) * gamma + beta


def block_kernel(x_ref, state_ref,
                 g1_ref, be1_ref,
                 wqkv_ref,                      # fused [Wq*scale | Wk | Wv], bf16
                 wp_ref, bp_ref,
                 g2_ref, be2_ref,
                 w1_ref, b1_ref,
                 w3_ref, b3_ref,
                 out_x_ref, out_state_ref,
                 q_scr, k_scr, v_scr,           # (nh, T, hs) VMEM scratch
                 *, num_heads, head_size, block_q, causal):
    T, E = x_ref.shape                          # full sequence for this batch elem
    nh, hs = num_heads, head_size
    qi = pl.program_id(1)

    # ---- once per batch element: LN1 + fused QKV projection ---------------
    # K/V stay resident in scratch across all query tiles of this batch elem.
    @pl.when(qi == 0)
    def _():
        xn = _layernorm(x_ref[...], g1_ref[0, :], be1_ref[0, :])        # (T,E) f32
        qkv = jnp.dot(xn.astype(jnp.bfloat16), wqkv_ref[...],
                      preferred_element_type=jnp.float32)               # (T,3E) f32
        # Head-major split happens once per batch element (the only lane
        # relayout), not per query tile / per head later.
        for h in range(nh):
            q_scr[h, :, :] = qkv[:, h * hs:(h + 1) * hs]
            k_scr[h, :, :] = qkv[:, E + h * hs:E + (h + 1) * hs].astype(jnp.bfloat16)
            v_scr[h, :, :] = qkv[:, 2 * E + h * hs:2 * E + (h + 1) * hs].astype(jnp.bfloat16)

    row0 = pl.multiple_of(qi * block_q, block_q)

    # ---- attention for this query tile, all heads batched on the MXU ------
    q_h = q_scr[:, pl.ds(row0, block_q), :].astype(jnp.bfloat16)        # (nh,Tq,hs)
    k_h = k_scr[...]                                                    # (nh,T,hs)
    v_h = v_scr[...]                                                    # (nh,T,hs)

    # scale already folded into Wq, so this is just q @ k.T
    s = jnp.einsum('hqd,hkd->hqk', q_h, k_h,
                   preferred_element_type=jnp.float32)                  # (nh,Tq,T)

    if causal:
        rows = row0 + jax.lax.broadcasted_iota(jnp.int32, (block_q, T), 0)
        cols = jax.lax.broadcasted_iota(jnp.int32, (block_q, T), 1)
        s = jnp.where((cols <= rows)[None, :, :], s, -1e30)             # masked_fill

    # softmax (f32 statistics, approx reciprocal on the EUP)
    m = jnp.max(s, axis=-1, keepdims=True)
    p = jnp.exp(s - m)
    denom = jnp.sum(p, axis=-1, keepdims=True)
    p = p * pl.reciprocal(denom, approx=True)
    # attention dropout: identity (dropout == 0)

    o_h = jnp.einsum('hqk,hkd->hqd', p.astype(jnp.bfloat16), v_h,
                     preferred_element_type=jnp.float32)                # (nh,Tq,hs)

    # output projection: accumulate per-head (Tq,hs)@(hs,E) into one f32 tile
    att = jnp.dot(o_h[0].astype(jnp.bfloat16), wp_ref[0:hs, :],
                  preferred_element_type=jnp.float32)
    for h in range(1, nh):
        att += jnp.dot(o_h[h].astype(jnp.bfloat16),
                       wp_ref[h * hs:(h + 1) * hs, :],
                       preferred_element_type=jnp.float32)
    att = att + bp_ref[0, :]
    # projection dropout: identity (dropout == 0)

    x_tile = x_ref[pl.ds(row0, block_q), :]                             # (Tq,E) f32
    x_res = x_tile + att                                                # residual

    # ---- LN2 + FeedForwardWithCompressionState ----------------------------
    xn2 = _layernorm(x_res, g2_ref[0, :], be2_ref[0, :])
    h_pre = (jnp.dot(xn2.astype(jnp.bfloat16), w1_ref[...],
                     preferred_element_type=jnp.float32)
             + b1_ref[0, :] + state_ref[...])                           # net1(x)+state
    h_act = jnp.tanh(h_pre)                                             # 'tanh' nonlin
    out_state_ref[...] = h_act                                          # new state
    y = (jnp.dot(h_act.astype(jnp.bfloat16), w3_ref[...],
                 preferred_element_type=jnp.float32) + b3_ref[0, :])    # net3
    # net4 dropout: identity; NoYokeResidual -> no residual after the ffwd
    out_x_ref[...] = y


# ---------------------------------------------------------------------------
# Wrapper
# ---------------------------------------------------------------------------

def block_forward(x, state, params, *, num_heads, causal=True, block_q=8):
    (g1, be1, wq, wk, wv, wp, bp, g2, be2, w1, b1, w3, b3) = params
    B, T, E = x.shape
    H = state.shape[-1]
    assert E % num_heads == 0
    hs = E // num_heads
    if T % block_q != 0 or block_q % 8 != 0:
        block_q = T
    nqt = T // block_q

    # Fuse Q/K/V weights into one (E, 3E) bf16 matmul; fold the attention
    # scale into the Q columns (zero in-kernel cost).
    scale = hs ** -0.5
    wqkv = jnp.concatenate([wq * scale, wk, wv], axis=1).astype(jnp.bfloat16)
    wp_b = wp.astype(jnp.bfloat16)
    w1_b = w1.astype(jnp.bfloat16)
    w3_b = w3.astype(jnp.bfloat16)

    kernel = functools.partial(block_kernel, num_heads=num_heads, head_size=hs,
                               block_q=block_q, causal=causal)

    def const_spec(shape):
        return pl.BlockSpec(shape, lambda b, q, _n=len(shape): (0,) * _n)

    in_specs = [
        pl.BlockSpec((None, T, E), lambda b, q: (b, 0, 0)),        # x (full seq / batch)
        pl.BlockSpec((None, block_q, H), lambda b, q: (b, q, 0)),  # state tile
        const_spec((1, E)), const_spec((1, E)),                    # ln1 gamma/beta
        const_spec((E, 3 * E)),                                    # fused Wqkv (bf16)
        const_spec((E, E)), const_spec((1, E)),                    # proj W (bf16), b
        const_spec((1, E)), const_spec((1, E)),                    # ln2 gamma/beta
        const_spec((E, H)), const_spec((1, H)),                    # net1 W (bf16), b
        const_spec((H, E)), const_spec((1, E)),                    # net3 W (bf16), b
    ]
    out_specs = [
        pl.BlockSpec((None, block_q, E), lambda b, q: (b, q, 0)),  # x out (lane-dense)
        pl.BlockSpec((None, block_q, H), lambda b, q: (b, q, 0)),  # state out
    ]
    out_shape = [
        jax.ShapeDtypeStruct((B, T, E), jnp.float32),
        jax.ShapeDtypeStruct((B, T, H), jnp.float32),
    ]
    scratch_shapes = [
        pltpu.VMEM((num_heads, T, hs), jnp.float32),   # q (f32: simple aligned dyn-slice)
        pltpu.VMEM((num_heads, T, hs), jnp.bfloat16),  # k (resident across q tiles)
        pltpu.VMEM((num_heads, T, hs), jnp.bfloat16),  # v
    ]

    return pl.pallas_call(
        kernel,
        grid=(B, nqt),
        in_specs=in_specs,
        out_specs=out_specs,
        out_shape=out_shape,
        scratch_shapes=scratch_shapes,
        compiler_params=pltpu.CompilerParams(
            # batch axis is megacore-parallel; the query-tile axis carries the
            # K/V scratch dependency so it must stay "arbitrary".
            dimension_semantics=("parallel", "arbitrary")),
    )(x, state, g1, be1, wqkv, wp_b, bp, g2, be2, w1_b, b1, w3_b, b3)


# ---------------------------------------------------------------------------
# Pure-JAX f32 reference (verification only)
# ---------------------------------------------------------------------------

def block_reference(x, state, params, *, num_heads, causal=True):
    (g1, be1, wq, wk, wv, wp, bp, g2, be2, w1, b1, w3, b3) = params
    B, T, E = x.shape
    hs = E // num_heads

    def ln(v, g, b):
        mu = jnp.mean(v, -1, keepdims=True)
        var = jnp.mean((v - mu) ** 2, -1, keepdims=True)
        return (v - mu) / jnp.sqrt(var + 1e-5) * g[0] + b[0]

    xn = ln(x, g1, be1)
    q = xn @ wq; k = xn @ wk; v = xn @ wv
    mask = jnp.tril(jnp.ones((T, T), bool))
    outs = []
    for h in range(num_heads):
        sl = slice(h * hs, (h + 1) * hs)
        wei = jnp.einsum('btd,bsd->bts', q[..., sl], k[..., sl]) * hs ** -0.5
        if causal:
            wei = jnp.where(mask, wei, -1e30)
        p = jax.nn.softmax(wei, axis=-1)
        outs.append(jnp.einsum('bts,bsd->btd', p, v[..., sl]))
    att = jnp.concatenate(outs, -1) @ wp + bp[0]
    x = x + att
    xn2 = ln(x, g2, be2)
    hcur = jnp.tanh(xn2 @ w1 + b1[0] + state)
    return hcur @ w3 + b3[0], hcur


# ---------------------------------------------------------------------------
# Main
# ---------------------------------------------------------------------------

if __name__ == "__main__":
    # Small, lane-dense shapes consistent with the module.
    B, T, E = 2, 16, 128
    num_heads = 4
    H = 4 * E                       # linear_hidden_size default = embedding*4
    causal = True
    # dropout = 0.0 -> all Dropout layers are identity.

    key = jax.random.PRNGKey(0)
    ks = jax.random.split(key, 12)

    def w(k, shape, s=0.02):
        return jax.random.normal(k, shape, jnp.float32) * s

    params = (
        jnp.ones((1, E), jnp.float32),          # ln1 gamma
        jnp.zeros((1, E), jnp.float32),         # ln1 beta
        w(ks[0], (E, E)),                       # Wq (per-head, concatenated)
        w(ks[1], (E, E)),                       # Wk
        w(ks[2], (E, E)),                       # Wv
        w(ks[3], (E, E)),                       # proj W
        w(ks[4], (1, E)),                       # proj b
        jnp.ones((1, E), jnp.float32),          # ln2 gamma
        jnp.zeros((1, E), jnp.float32),         # ln2 beta
        w(ks[5], (E, H)),                       # net1 W
        w(ks[6], (1, H)),                       # net1 b
        w(ks[7], (H, E)),                       # net3 W
        w(ks[8], (1, E)),                       # net3 b
    )

    x = jax.random.normal(ks[9], (B, T, E), jnp.float32)
    state = jax.random.normal(ks[10], (B, T, H), jnp.float32)

    out_x, out_state = block_forward(x, state, params,
                                     num_heads=num_heads, causal=causal,
                                     block_q=8)
    jax.block_until_ready((out_x, out_state))

    ref_x, ref_state = block_reference(x, state, params,
                                       num_heads=num_heads, causal=causal)

    # bf16 MXU operands + approx-reciprocal softmax -> loosened tolerance
    # vs. the f32 reference (errors observed are O(1e-3)).
    err_x = float(jnp.max(jnp.abs(out_x - ref_x)))
    err_s = float(jnp.max(jnp.abs(out_state - ref_state)))
    assert err_x < 3e-2, f"out_x max abs err {err_x}"
    assert err_s < 3e-2, f"out_state max abs err {err_s}"

    print("KERNEL_OK")
</pallas_src>

<mosaic_0001>
module attributes {stable_mosaic.version = 11 : i64} {
  func.func @block_kernel(%arg0: i32, %arg1: i32, %arg2: memref<1x16x128xf32, #tpu.memory_space<vmem>>, %arg3: memref<1x8x512xf32, #tpu.memory_space<vmem>>, %arg4: memref<1x128xf32, #tpu.memory_space<vmem>>, %arg5: memref<1x128xf32, #tpu.memory_space<vmem>>, %arg6: memref<128x384xbf16, #tpu.memory_space<vmem>>, %arg7: memref<128x128xbf16, #tpu.memory_space<vmem>>, %arg8: memref<1x128xf32, #tpu.memory_space<vmem>>, %arg9: memref<1x128xf32, #tpu.memory_space<vmem>>, %arg10: memref<1x128xf32, #tpu.memory_space<vmem>>, %arg11: memref<128x512xbf16, #tpu.memory_space<vmem>>, %arg12: memref<1x512xf32, #tpu.memory_space<vmem>>, %arg13: memref<512x128xbf16, #tpu.memory_space<vmem>>, %arg14: memref<1x128xf32, #tpu.memory_space<vmem>>, %arg15: memref<1x8x128xf32, #tpu.memory_space<vmem>>, %arg16: memref<1x8x512xf32, #tpu.memory_space<vmem>>, %arg17: memref<4x16x32xf32, #tpu.memory_space<vmem>>, %arg18: memref<4x16x32xbf16, #tpu.memory_space<vmem>>, %arg19: memref<4x16x32xbf16, #tpu.memory_space<vmem>>) attributes {dimension_semantics = [#tpu.dimension_semantics<parallel>, #tpu.dimension_semantics<arbitrary>], iteration_bounds = array<i64: 2, 2>, scalar_prefetch = 0 : i64, scratch_operands = 3 : i64, tpu.core_type = #tpu.core_type<tc>, window_params = [{transform_indices = @transform_0, window_bounds = array<i64: 1, 16, 128>}, {transform_indices = @transform_1, window_bounds = array<i64: 1, 8, 512>}, {pipeline_mode = #tpu.pipeline_mode<synchronous>, transform_indices = @transform_2, window_bounds = array<i64: 1, 128>}, {pipeline_mode = #tpu.pipeline_mode<synchronous>, transform_indices = @transform_3, window_bounds = array<i64: 1, 128>}, {pipeline_mode = #tpu.pipeline_mode<synchronous>, transform_indices = @transform_4, window_bounds = array<i64: 128, 384>}, {pipeline_mode = #tpu.pipeline_mode<synchronous>, transform_indices = @transform_5, window_bounds = array<i64: 128, 128>}, {pipeline_mode = #tpu.pipeline_mode<synchronous>, transform_indices = @transform_6, window_bounds = array<i64: 1, 128>}, {pipeline_mode = #tpu.pipeline_mode<synchronous>, transform_indices = @transform_7, window_bounds = array<i64: 1, 128>}, {pipeline_mode = #tpu.pipeline_mode<synchronous>, transform_indices = @transform_8, window_bounds = array<i64: 1, 128>}, {pipeline_mode = #tpu.pipeline_mode<synchronous>, transform_indices = @transform_9, window_bounds = array<i64: 128, 512>}, {pipeline_mode = #tpu.pipeline_mode<synchronous>, transform_indices = @transform_10, window_bounds = array<i64: 1, 512>}, {pipeline_mode = #tpu.pipeline_mode<synchronous>, transform_indices = @transform_11, window_bounds = array<i64: 512, 128>}, {pipeline_mode = #tpu.pipeline_mode<synchronous>, transform_indices = @transform_12, window_bounds = array<i64: 1, 128>}, {transform_indices = @transform_13, window_bounds = array<i64: 1, 8, 128>}, {transform_indices = @transform_14, window_bounds = array<i64: 1, 8, 512>}]} {
    %c0_i32 = arith.constant 0 : i32
    %0 = arith.cmpi eq, %arg1, %c0_i32 : i32
    %1 = arith.extui %0 : i1 to i32
    %c0_i32_0 = arith.constant 0 : i32
    %2 = arith.cmpi ne, %1, %c0_i32_0 : i32
    scf.if %2 {
      %c0_53 = arith.constant 0 : index
      %c0_54 = arith.constant 0 : index
      %c0_55 = arith.constant 0 : index
      %119 = vector.load %arg2[%c0_53, %c0_54, %c0_55] : memref<1x16x128xf32, #tpu.memory_space<vmem>>, vector<1x16x128xf32>
      %120 = vector.shape_cast %119 : vector<1x16x128xf32> to vector<16x128xf32>
      %c0_56 = arith.constant 0 : index
      %c0_57 = arith.constant 0 : index
      %121 = vector.load %arg4[%c0_56, %c0_57] : memref<1x128xf32, #tpu.memory_space<vmem>>, vector<1x128xf32>
      %122 = vector.shape_cast %121 : vector<1x128xf32> to vector<128xf32>
      %c0_58 = arith.constant 0 : index
      %c0_59 = arith.constant 0 : index
      %123 = vector.load %arg5[%c0_58, %c0_59] : memref<1x128xf32, #tpu.memory_space<vmem>>, vector<1x128xf32>
      %124 = vector.shape_cast %123 : vector<1x128xf32> to vector<128xf32>
      %cst_60 = arith.constant dense<0.000000e+00> : vector<16xf32>
      %125 = vector.multi_reduction <add>, %120, %cst_60 [1] : vector<16x128xf32> to vector<16xf32>
      %126 = vector.shape_cast %125 : vector<16xf32> to vector<16x1xf32>
      %cst_61 = arith.constant 1.280000e+02 : f32
      %127 = vector.broadcast %cst_61 : f32 to vector<16x1xf32>
      %128 = arith.divf %126, %127 : vector<16x1xf32>
      %129 = vector.broadcast %128 : vector<16x1xf32> to vector<16x128xf32>
      %130 = arith.subf %120, %129 : vector<16x128xf32>
      %131 = arith.mulf %130, %130 : vector<16x128xf32>
      %cst_62 = arith.constant dense<0.000000e+00> : vector<16xf32>
      %132 = vector.multi_reduction <add>, %131, %cst_62 [1] : vector<16x128xf32> to vector<16xf32>
      %133 = vector.shape_cast %132 : vector<16xf32> to vector<16x1xf32>
      %cst_63 = arith.constant 1.280000e+02 : f32
      %134 = vector.broadcast %cst_63 : f32 to vector<16x1xf32>
      %135 = arith.divf %133, %134 : vector<16x1xf32>
      %136 = vector.broadcast %128 : vector<16x1xf32> to vector<16x128xf32>
      %137 = arith.subf %120, %136 : vector<16x128xf32>
      %cst_64 = arith.constant 9.99999974E-6 : f32
      %138 = vector.broadcast %cst_64 : f32 to vector<16x1xf32>
      %139 = arith.addf %135, %138 : vector<16x1xf32>
      %140 = math.rsqrt %139 : vector<16x1xf32>
      %141 = vector.broadcast %140 : vector<16x1xf32> to vector<16x128xf32>
      %142 = arith.mulf %137, %141 : vector<16x128xf32>
      %143 = vector.shape_cast %122 : vector<128xf32> to vector<1x128xf32>
      %144 = vector.broadcast %143 : vector<1x128xf32> to vector<16x128xf32>
      %145 = arith.mulf %142, %144 : vector<16x128xf32>
      %146 = vector.shape_cast %124 : vector<128xf32> to vector<1x128xf32>
      %147 = vector.broadcast %146 : vector<1x128xf32> to vector<16x128xf32>
      %148 = arith.addf %145, %147 : vector<16x128xf32>
      %149 = arith.truncf %148 : vector<16x128xf32> to vector<16x128xbf16>
      %c0_65 = arith.constant 0 : index
      %c0_66 = arith.constant 0 : index
      %150 = vector.load %arg6[%c0_65, %c0_66] : memref<128x384xbf16, #tpu.memory_space<vmem>>, vector<128x384xbf16>
      %cst_67 = arith.constant dense<0.000000e+00> : vector<16x384xf32>
      %151 = tpu.matmul %149, %150, %cst_67 {dimension_numbers = #tpu.dot_dimension_numbers<[1], [0], [0], [1], [0, 0, 1, 1], [], []>} : vector<16x128xbf16>, vector<128x384xbf16>, vector<16x384xf32> -> vector<16x384xf32>
      %152 = vector.extract_strided_slice %151 {offsets = [0, 0], sizes = [16, 32], strides = [1, 1]} : vector<16x384xf32> to vector<16x32xf32>
      %c0_68 = arith.constant 0 : index
      %c0_69 = arith.constant 0 : index
      %c0_70 = arith.constant 0 : index
      %153 = vector.load %arg17[%c0_68, %c0_69, %c0_70] : memref<4x16x32xf32, #tpu.memory_space<vmem>>, vector<1x16x32xf32>
      %154 = vector.shape_cast %153 : vector<1x16x32xf32> to vector<16x32xf32>
      %155 = vector.shape_cast %152 : vector<16x32xf32> to vector<1x16x32xf32>
      tpu.vector_store %arg17[%c0_68, %c0_69, %c0_70], %155 {strides = array<i32>} : memref<4x16x32xf32, #tpu.memory_space<vmem>>, vector<1x16x32xf32>,
      %156 = vector.extract_strided_slice %151 {offsets = [0, 128], sizes = [16, 32], strides = [1, 1]} : vector<16x384xf32> to vector<16x32xf32>
      %157 = arith.truncf %156 : vector<16x32xf32> to vector<16x32xbf16>
      %c0_71 = arith.constant 0 : index
      %c0_72 = arith.constant 0 : index
      %c0_73 = arith.constant 0 : index
      %158 = vector.load %arg18[%c0_71, %c0_72, %c0_73] : memref<4x16x32xbf16, #tpu.memory_space<vmem>>, vector<1x16x32xbf16>
      %159 = vector.shape_cast %158 : vector<1x16x32xbf16> to vector<16x32xbf16>
      %160 = vector.shape_cast %157 : vector<16x32xbf16> to vector<1x16x32xbf16>
      tpu.vector_store %arg18[%c0_71, %c0_72, %c0_73], %160 {strides = array<i32>} : memref<4x16x32xbf16, #tpu.memory_space<vmem>>, vector<1x16x32xbf16>,
      %161 = vector.extract_strided_slice %151 {offsets = [0, 256], sizes = [16, 32], strides = [1, 1]} : vector<16x384xf32> to vector<16x32xf32>
      %162 = arith.truncf %161 : vector<16x32xf32> to vector<16x32xbf16>
      %c0_74 = arith.constant 0 : index
      %c0_75 = arith.constant 0 : index
      %c0_76 = arith.constant 0 : index
      %163 = vector.load %arg19[%c0_74, %c0_75, %c0_76] : memref<4x16x32xbf16, #tpu.memory_space<vmem>>, vector<1x16x32xbf16>
      %164 = vector.shape_cast %163 : vector<1x16x32xbf16> to vector<16x32xbf16>
      %165 = vector.shape_cast %162 : vector<16x32xbf16> to vector<1x16x32xbf16>
      tpu.vector_store %arg19[%c0_74, %c0_75, %c0_76], %165 {strides = array<i32>} : memref<4x16x32xbf16, #tpu.memory_space<vmem>>, vector<1x16x32xbf16>,
      %166 = vector.extract_strided_slice %151 {offsets = [0, 32], sizes = [16, 32], strides = [1, 1]} : vector<16x384xf32> to vector<16x32xf32>
      %c1 = arith.constant 1 : index
      %c0_77 = arith.constant 0 : index
      %c0_78 = arith.constant 0 : index
      %167 = vector.load %arg17[%c1, %c0_77, %c0_78] : memref<4x16x32xf32, #tpu.memory_space<vmem>>, vector<1x16x32xf32>
      %168 = vector.shape_cast %167 : vector<1x16x32xf32> to vector<16x32xf32>
      %169 = vector.shape_cast %166 : vector<16x32xf32> to vector<1x16x32xf32>
      tpu.vector_store %arg17[%c1, %c0_77, %c0_78], %169 {strides = array<i32>} : memref<4x16x32xf32, #tpu.memory_space<vmem>>, vector<1x16x32xf32>,
      %170 = vector.extract_strided_slice %151 {offsets = [0, 160], sizes = [16, 32], strides = [1, 1]} : vector<16x384xf32> to vector<16x32xf32>
      %171 = arith.truncf %170 : vector<16x32xf32> to vector<16x32xbf16>
      %c1_79 = arith.constant 1 : index
      %c0_80 = arith.constant 0 : index
      %c0_81 = arith.constant 0 : index
      %172 = vector.load %arg18[%c1_79, %c0_80, %c0_81] : memref<4x16x32xbf16, #tpu.memory_space<vmem>>, vector<1x16x32xbf16>
      %173 = vector.shape_cast %172 : vector<1x16x32xbf16> to vector<16x32xbf16>
      %174 = vector.shape_cast %171 : vector<16x32xbf16> to vector<1x16x32xbf16>
      tpu.vector_store %arg18[%c1_79, %c0_80, %c0_81], %174 {strides = array<i32>} : memref<4x16x32xbf16, #tpu.memory_space<vmem>>, vector<1x16x32xbf16>,
      %175 = vector.extract_strided_slice %151 {offsets = [0, 288], sizes = [16, 32], strides = [1, 1]} : vector<16x384xf32> to vector<16x32xf32>
      %176 = arith.truncf %175 : vector<16x32xf32> to vector<16x32xbf16>
      %c1_82 = arith.constant 1 : index
      %c0_83 = arith.constant 0 : index
      %c0_84 = arith.constant 0 : index
      %177 = vector.load %arg19[%c1_82, %c0_83, %c0_84] : memref<4x16x32xbf16, #tpu.memory_space<vmem>>, vector<1x16x32xbf16>
      %178 = vector.shape_cast %177 : vector<1x16x32xbf16> to vector<16x32xbf16>
      %179 = vector.shape_cast %176 : vector<16x32xbf16> to vector<1x16x32xbf16>
      tpu.vector_store %arg19[%c1_82, %c0_83, %c0_84], %179 {strides = array<i32>} : memref<4x16x32xbf16, #tpu.memory_space<vmem>>, vector<1x16x32xbf16>,
      %180 = vector.extract_strided_slice %151 {offsets = [0, 64], sizes = [16, 32], strides = [1, 1]} : vector<16x384xf32> to vector<16x32xf32>
      %c2 = arith.constant 2 : index
      %c0_85 = arith.constant 0 : index
      %c0_86 = arith.constant 0 : index
      %181 = vector.load %arg17[%c2, %c0_85, %c0_86] : memref<4x16x32xf32, #tpu.memory_space<vmem>>, vector<1x16x32xf32>
      %182 = vector.shape_cast %181 : vector<1x16x32xf32> to vector<16x32xf32>
      %183 = vector.shape_cast %180 : vector<16x32xf32> to vector<1x16x32xf32>
      tpu.vector_store %arg17[%c2, %c0_85, %c0_86], %183 {strides = array<i32>} : memref<4x16x32xf32, #tpu.memory_space<vmem>>, vector<1x16x32xf32>,
      %184 = vector.extract_strided_slice %151 {offsets = [0, 192], sizes = [16, 32], strides = [1, 1]} : vector<16x384xf32> to vector<16x32xf32>
      %185 = arith.truncf %184 : vector<16x32xf32> to vector<16x32xbf16>
      %c2_87 = arith.constant 2 : index
      %c0_88 = arith.constant 0 : index
      %c0_89 = arith.constant 0 : index
      %186 = vector.load %arg18[%c2_87, %c0_88, %c0_89] : memref<4x16x32xbf16, #tpu.memory_space<vmem>>, vector<1x16x32xbf16>
      %187 = vector.shape_cast %186 : vector<1x16x32xbf16> to vector<16x32xbf16>
      %188 = vector.shape_cast %185 : vector<16x32xbf16> to vector<1x16x32xbf16>
      tpu.vector_store %arg18[%c2_87, %c0_88, %c0_89], %188 {strides = array<i32>} : memref<4x16x32xbf16, #tpu.memory_space<vmem>>, vector<1x16x32xbf16>,
      %189 = vector.extract_strided_slice %151 {offsets = [0, 320], sizes = [16, 32], strides = [1, 1]} : vector<16x384xf32> to vector<16x32xf32>
      %190 = arith.truncf %189 : vector<16x32xf32> to vector<16x32xbf16>
      %c2_90 = arith.constant 2 : index
      %c0_91 = arith.constant 0 : index
      %c0_92 = arith.constant 0 : index
      %191 = vector.load %arg19[%c2_90, %c0_91, %c0_92] : memref<4x16x32xbf16, #tpu.memory_space<vmem>>, vector<1x16x32xbf16>
      %192 = vector.shape_cast %191 : vector<1x16x32xbf16> to vector<16x32xbf16>
      %193 = vector.shape_cast %190 : vector<16x32xbf16> to vector<1x16x32xbf16>
      tpu.vector_store %arg19[%c2_90, %c0_91, %c0_92], %193 {strides = array<i32>} : memref<4x16x32xbf16, #tpu.memory_space<vmem>>, vector<1x16x32xbf16>,
      %194 = vector.extract_strided_slice %151 {offsets = [0, 96], sizes = [16, 32], strides = [1, 1]} : vector<16x384xf32> to vector<16x32xf32>
      %c3 = arith.constant 3 : index
      %c0_93 = arith.constant 0 : index
      %c0_94 = arith.constant 0 : index
      %195 = vector.load %arg17[%c3, %c0_93, %c0_94] : memref<4x16x32xf32, #tpu.memory_space<vmem>>, vector<1x16x32xf32>
      %196 = vector.shape_cast %195 : vector<1x16x32xf32> to vector<16x32xf32>
      %197 = vector.shape_cast %194 : vector<16x32xf32> to vector<1x16x32xf32>
      tpu.vector_store %arg17[%c3, %c0_93, %c0_94], %197 {strides = array<i32>} : memref<4x16x32xf32, #tpu.memory_space<vmem>>, vector<1x16x32xf32>,
      %198 = vector.extract_strided_slice %151 {offsets = [0, 224], sizes = [16, 32], strides = [1, 1]} : vector<16x384xf32> to vector<16x32xf32>
      %199 = arith.truncf %198 : vector<16x32xf32> to vector<16x32xbf16>
      %c3_95 = arith.constant 3 : index
      %c0_96 = arith.constant 0 : index
      %c0_97 = arith.constant 0 : index
      %200 = vector.load %arg18[%c3_95, %c0_96, %c0_97] : memref<4x16x32xbf16, #tpu.memory_space<vmem>>, vector<1x16x32xbf16>
      %201 = vector.shape_cast %200 : vector<1x16x32xbf16> to vector<16x32xbf16>
      %202 = vector.shape_cast %199 : vector<16x32xbf16> to vector<1x16x32xbf16>
      tpu.vector_store %arg18[%c3_95, %c0_96, %c0_97], %202 {strides = array<i32>} : memref<4x16x32xbf16, #tpu.memory_space<vmem>>, vector<1x16x32xbf16>,
      %203 = vector.extract_strided_slice %151 {offsets = [0, 352], sizes = [16, 32], strides = [1, 1]} : vector<16x384xf32> to vector<16x32xf32>
      %204 = arith.truncf %203 : vector<16x32xf32> to vector<16x32xbf16>
      %c3_98 = arith.constant 3 : index
      %c0_99 = arith.constant 0 : index
      %c0_100 = arith.constant 0 : index
      %205 = vector.load %arg19[%c3_98, %c0_99, %c0_100] : memref<4x16x32xbf16, #tpu.memory_space<vmem>>, vector<1x16x32xbf16>
      %206 = vector.shape_cast %205 : vector<1x16x32xbf16> to vector<16x32xbf16>
      %207 = vector.shape_cast %204 : vector<16x32xbf16> to vector<1x16x32xbf16>
      tpu.vector_store %arg19[%c3_98, %c0_99, %c0_100], %207 {strides = array<i32>} : memref<4x16x32xbf16, #tpu.memory_space<vmem>>, vector<1x16x32xbf16>,
    } else {
    }
    %c8_i32 = arith.constant 8 : i32
    %3 = arith.muli %arg1, %c8_i32 : i32
    %4 = tpu.assume_multiple %3, 8 : i32
    %c0 = arith.constant 0 : index
    %5 = arith.index_cast %4 : i32 to index
    %c0_1 = arith.constant 0 : index
    %6 = vector.load %arg17[%c0, %5, %c0_1] : memref<4x16x32xf32, #tpu.memory_space<vmem>>, vector<4x8x32xf32>
    %7 = arith.truncf %6 : vector<4x8x32xf32> to vector<4x8x32xbf16>
    %c0_2 = arith.constant 0 : index
    %c0_3 = arith.constant 0 : index
    %c0_4 = arith.constant 0 : index
    %8 = vector.load %arg18[%c0_2, %c0_3, %c0_4] : memref<4x16x32xbf16, #tpu.memory_space<vmem>>, vector<4x16x32xbf16>
    %c0_5 = arith.constant 0 : index
    %c0_6 = arith.constant 0 : index
    %c0_7 = arith.constant 0 : index
    %9 = vector.load %arg19[%c0_5, %c0_6, %c0_7] : memref<4x16x32xbf16, #tpu.memory_space<vmem>>, vector<4x16x32xbf16>
    "tpu.trace_start"() <{level = 10 : i32, message = "hqd,hkd->hqk"}> : () -> ()
    %cst = arith.constant dense<0.000000e+00> : vector<4x8x16xf32>
    %10 = tpu.matmul %7, %8, %cst {dimension_numbers = #tpu.dot_dimension_numbers<[2], [2], [1], [1], [0, 0, 0, 1, 1, 1], [0], [0]>} : vector<4x8x32xbf16>, vector<4x16x32xbf16>, vector<4x8x16xf32> -> vector<4x8x16xf32>
    "tpu.trace_stop"() : () -> ()
    %11 = tpu.iota {dimensions = array<i32: 0>} : vector<8x16xi32>
    %12 = vector.broadcast %4 : i32 to vector<8x16xi32>
    %13 = arith.addi %12, %11 : vector<8x16xi32>
    %14 = tpu.iota {dimensions = array<i32: 1>} : vector<8x16xi32>
    %15 = arith.cmpi sle, %14, %13 : vector<8x16xi32>
    %16 = vector.shape_cast %15 : vector<8x16xi1> to vector<1x8x16xi1>
    %cst_8 = arith.constant -1.000000e+30 : f32
    %17 = vector.shape_cast %16 : vector<1x8x16xi1> to vector<1x8x16xi1>
    %18 = vector.broadcast %17 : vector<1x8x16xi1> to vector<4x8x16xi1>
    %19 = vector.broadcast %cst_8 : f32 to vector<4x8x16xf32>
    %20 = arith.select %18, %10, %19 : vector<4x8x16xi1>, vector<4x8x16xf32>
    %cst_9 = arith.constant dense<0xFF800000> : vector<4x8xf32>
    %21 = vector.multi_reduction <maximumf>, %20, %cst_9 [2] : vector<4x8x16xf32> to vector<4x8xf32>
    %22 = vector.shape_cast %21 : vector<4x8xf32> to vector<4x8x1xf32>
    %23 = vector.broadcast %22 : vector<4x8x1xf32> to vector<4x8x16xf32>
    %24 = arith.subf %20, %23 : vector<4x8x16xf32>
    %25 = math.exp %24 : vector<4x8x16xf32>
    %cst_10 = arith.constant dense<0.000000e+00> : vector<4x8xf32>
    %26 = vector.multi_reduction <add>, %25, %cst_10 [2] : vector<4x8x16xf32> to vector<4x8xf32>
    %27 = vector.shape_cast %26 : vector<4x8xf32> to vector<4x8x1xf32>
    %28 = tpu.reciprocal %27 {approx = true} : vector<4x8x1xf32> -> vector<4x8x1xf32>
    %29 = vector.broadcast %28 : vector<4x8x1xf32> to vector<4x8x16xf32>
    %30 = arith.mulf %25, %29 : vector<4x8x16xf32>
    %31 = arith.truncf %30 : vector<4x8x16xf32> to vector<4x8x16xbf16>
    "tpu.trace_start"() <{level = 10 : i32, message = "hqk,hkd->hqd"}> : () -> ()
    %cst_11 = arith.constant dense<0.000000e+00> : vector<4x8x32xf32>
    %32 = tpu.matmul %31, %9, %cst_11 {dimension_numbers = #tpu.dot_dimension_numbers<[2], [1], [1], [2], [0, 0, 0, 1, 1, 2], [0], [0]>} : vector<4x8x16xbf16>, vector<4x16x32xbf16>, vector<4x8x32xf32> -> vector<4x8x32xf32>
    "tpu.trace_stop"() : () -> ()
    %33 = vector.extract_strided_slice %32 {offsets = [0, 0, 0], sizes = [1, 8, 32], strides = [1, 1, 1]} : vector<4x8x32xf32> to vector<1x8x32xf32>
    %34 = vector.shape_cast %33 : vector<1x8x32xf32> to vector<8x32xf32>
    %35 = arith.truncf %34 : vector<8x32xf32> to vector<8x32xbf16>
    %c0_12 = arith.constant 0 : index
    %c0_13 = arith.constant 0 : index
    %36 = vector.load %arg7[%c0_12, %c0_13] : memref<128x128xbf16, #tpu.memory_space<vmem>>, vector<32x128xbf16>
    %cst_14 = arith.constant dense<0.000000e+00> : vector<8x128xf32>
    %37 = tpu.matmul %35, %36, %cst_14 {dimension_numbers = #tpu.dot_dimension_numbers<[1], [0], [0], [1], [0, 0, 1, 1], [], []>} : vector<8x32xbf16>, vector<32x128xbf16>, vector<8x128xf32> -> vector<8x128xf32>
    %38 = vector.extract_strided_slice %32 {offsets = [1, 0, 0], sizes = [1, 8, 32], strides = [1, 1, 1]} : vector<4x8x32xf32> to vector<1x8x32xf32>
    %39 = vector.shape_cast %38 : vector<1x8x32xf32> to vector<8x32xf32>
    %40 = arith.truncf %39 : vector<8x32xf32> to vector<8x32xbf16>
    %c32 = arith.constant 32 : index
    %c0_15 = arith.constant 0 : index
    %41 = vector.load %arg7[%c32, %c0_15] : memref<128x128xbf16, #tpu.memory_space<vmem>>, vector<32x128xbf16>
    %cst_16 = arith.constant dense<0.000000e+00> : vector<8x128xf32>
    %42 = tpu.matmul %40, %41, %cst_16 {dimension_numbers = #tpu.dot_dimension_numbers<[1], [0], [0], [1], [0, 0, 1, 1], [], []>} : vector<8x32xbf16>, vector<32x128xbf16>, vector<8x128xf32> -> vector<8x128xf32>
    %43 = arith.addf %37, %42 : vector<8x128xf32>
    %44 = vector.extract_strided_slice %32 {offsets = [2, 0, 0], sizes = [1, 8, 32], strides = [1, 1, 1]} : vector<4x8x32xf32> to vector<1x8x32xf32>
    %45 = vector.shape_cast %44 : vector<1x8x32xf32> to vector<8x32xf32>
    %46 = arith.truncf %45 : vector<8x32xf32> to vector<8x32xbf16>
    %c64 = arith.constant 64 : index
    %c0_17 = arith.constant 0 : index
    %47 = vector.load %arg7[%c64, %c0_17] : memref<128x128xbf16, #tpu.memory_space<vmem>>, vector<32x128xbf16>
    %cst_18 = arith.constant dense<0.000000e+00> : vector<8x128xf32>
    %48 = tpu.matmul %46, %47, %cst_18 {dimension_numbers = #tpu.dot_dimension_numbers<[1], [0], [0], [1], [0, 0, 1, 1], [], []>} : vector<8x32xbf16>, vector<32x128xbf16>, vector<8x128xf32> -> vector<8x128xf32>
    %49 = arith.addf %43, %48 : vector<8x128xf32>
    %50 = vector.extract_strided_slice %32 {offsets = [3, 0, 0], sizes = [1, 8, 32], strides = [1, 1, 1]} : vector<4x8x32xf32> to vector<1x8x32xf32>
    %51 = vector.shape_cast %50 : vector<1x8x32xf32> to vector<8x32xf32>
    %52 = arith.truncf %51 : vector<8x32xf32> to vector<8x32xbf16>
    %c96 = arith.constant 96 : index
    %c0_19 = arith.constant 0 : index
    %53 = vector.load %arg7[%c96, %c0_19] : memref<128x128xbf16, #tpu.memory_space<vmem>>, vector<32x128xbf16>
    %cst_20 = arith.constant dense<0.000000e+00> : vector<8x128xf32>
    %54 = tpu.matmul %52, %53, %cst_20 {dimension_numbers = #tpu.dot_dimension_numbers<[1], [0], [0], [1], [0, 0, 1, 1], [], []>} : vector<8x32xbf16>, vector<32x128xbf16>, vector<8x128xf32> -> vector<8x128xf32>
    %55 = arith.addf %49, %54 : vector<8x128xf32>
    %c0_21 = arith.constant 0 : index
    %c0_22 = arith.constant 0 : index
    %56 = vector.load %arg8[%c0_21, %c0_22] : memref<1x128xf32, #tpu.memory_space<vmem>>, vector<1x128xf32>
    %57 = vector.shape_cast %56 : vector<1x128xf32> to vector<128xf32>
    %58 = vector.shape_cast %57 : vector<128xf32> to vector<1x128xf32>
    %59 = vector.broadcast %58 : vector<1x128xf32> to vector<8x128xf32>
    %60 = arith.addf %55, %59 : vector<8x128xf32>
    %c0_23 = arith.constant 0 : index
    %61 = arith.index_cast %4 : i32 to index
    %c0_24 = arith.constant 0 : index
    %62 = vector.load %arg2[%c0_23, %61, %c0_24] : memref<1x16x128xf32, #tpu.memory_space<vmem>>, vector<1x8x128xf32>
    %63 = vector.shape_cast %62 : vector<1x8x128xf32> to vector<8x128xf32>
    %64 = arith.addf %63, %60 : vector<8x128xf32>
    %c0_25 = arith.constant 0 : index
    %c0_26 = arith.constant 0 : index
    %65 = vector.load %arg9[%c0_25, %c0_26] : memref<1x128xf32, #tpu.memory_space<vmem>>, vector<1x128xf32>
    %66 = vector.shape_cast %65 : vector<1x128xf32> to vector<128xf32>
    %c0_27 = arith.constant 0 : index
    %c0_28 = arith.constant 0 : index
    %67 = vector.load %arg10[%c0_27, %c0_28] : memref<1x128xf32, #tpu.memory_space<vmem>>, vector<1x128xf32>
    %68 = vector.shape_cast %67 : vector<1x128xf32> to vector<128xf32>
    %cst_29 = arith.constant dense<0.000000e+00> : vector<8xf32>
    %69 = vector.multi_reduction <add>, %64, %cst_29 [1] : vector<8x128xf32> to vector<8xf32>
    %70 = vector.shape_cast %69 : vector<8xf32> to vector<8x1xf32>
    %cst_30 = arith.constant 1.280000e+02 : f32
    %71 = vector.broadcast %cst_30 : f32 to vector<8x1xf32>
    %72 = arith.divf %70, %71 : vector<8x1xf32>
    %73 = vector.broadcast %72 : vector<8x1xf32> to vector<8x128xf32>
    %74 = arith.subf %64, %73 : vector<8x128xf32>
    %75 = arith.mulf %74, %74 : vector<8x128xf32>
    %cst_31 = arith.constant dense<0.000000e+00> : vector<8xf32>
    %76 = vector.multi_reduction <add>, %75, %cst_31 [1] : vector<8x128xf32> to vector<8xf32>
    %77 = vector.shape_cast %76 : vector<8xf32> to vector<8x1xf32>
    %cst_32 = arith.constant 1.280000e+02 : f32
    %78 = vector.broadcast %cst_32 : f32 to vector<8x1xf32>
    %79 = arith.divf %77, %78 : vector<8x1xf32>
    %80 = vector.broadcast %72 : vector<8x1xf32> to vector<8x128xf32>
    %81 = arith.subf %64, %80 : vector<8x128xf32>
    %cst_33 = arith.constant 9.99999974E-6 : f32
    %82 = vector.broadcast %cst_33 : f32 to vector<8x1xf32>
    %83 = arith.addf %79, %82 : vector<8x1xf32>
    %84 = math.rsqrt %83 : vector<8x1xf32>
    %85 = vector.broadcast %84 : vector<8x1xf32> to vector<8x128xf32>
    %86 = arith.mulf %81, %85 : vector<8x128xf32>
    %87 = vector.shape_cast %66 : vector<128xf32> to vector<1x128xf32>
    %88 = vector.broadcast %87 : vector<1x128xf32> to vector<8x128xf32>
    %89 = arith.mulf %86, %88 : vector<8x128xf32>
    %90 = vector.shape_cast %68 : vector<128xf32> to vector<1x128xf32>
    %91 = vector.broadcast %90 : vector<1x128xf32> to vector<8x128xf32>
    %92 = arith.addf %89, %91 : vector<8x128xf32>
    %93 = arith.truncf %92 : vector<8x128xf32> to vector<8x128xbf16>
    %c0_34 = arith.constant 0 : index
    %c0_35 = arith.constant 0 : index
    %94 = vector.load %arg11[%c0_34, %c0_35] : memref<128x512xbf16, #tpu.memory_space<vmem>>, vector<128x512xbf16>
    %cst_36 = arith.constant dense<0.000000e+00> : vector<8x512xf32>
    %95 = tpu.matmul %93, %94, %cst_36 {dimension_numbers = #tpu.dot_dimension_numbers<[1], [0], [0], [1], [0, 0, 1, 1], [], []>} : vector<8x128xbf16>, vector<128x512xbf16>, vector<8x512xf32> -> vector<8x512xf32>
    %c0_37 = arith.constant 0 : index
    %c0_38 = arith.constant 0 : index
    %96 = vector.load %arg12[%c0_37, %c0_38] : memref<1x512xf32, #tpu.memory_space<vmem>>, vector<1x512xf32>
    %97 = vector.shape_cast %96 : vector<1x512xf32> to vector<512xf32>
    %98 = vector.shape_cast %97 : vector<512xf32> to vector<1x512xf32>
    %99 = vector.broadcast %98 : vector<1x512xf32> to vector<8x512xf32>
    %100 = arith.addf %95, %99 : vector<8x512xf32>
    %c0_39 = arith.constant 0 : index
    %c0_40 = arith.constant 0 : index
    %c0_41 = arith.constant 0 : index
    %101 = vector.load %arg3[%c0_39, %c0_40, %c0_41] : memref<1x8x512xf32, #tpu.memory_space<vmem>>, vector<1x8x512xf32>
    %102 = vector.shape_cast %101 : vector<1x8x512xf32> to vector<8x512xf32>
    %103 = arith.addf %100, %102 : vector<8x512xf32>
    %104 = math.tanh %103 : vector<8x512xf32>
    %c0_42 = arith.constant 0 : index
    %c0_43 = arith.constant 0 : index
    %c0_44 = arith.constant 0 : index
    %105 = vector.load %arg16[%c0_42, %c0_43, %c0_44] : memref<1x8x512xf32, #tpu.memory_space<vmem>>, vector<1x8x512xf32>
    %106 = vector.shape_cast %105 : vector<1x8x512xf32> to vector<8x512xf32>
    %107 = vector.shape_cast %104 : vector<8x512xf32> to vector<1x8x512xf32>
    tpu.vector_store %arg16[%c0_42, %c0_43, %c0_44], %107 {strides = array<i32>} : memref<1x8x512xf32, #tpu.memory_space<vmem>>, vector<1x8x512xf32>,
    %108 = arith.truncf %104 : vector<8x512xf32> to vector<8x512xbf16>
    %c0_45 = arith.constant 0 : index
    %c0_46 = arith.constant 0 : index
    %109 = vector.load %arg13[%c0_45, %c0_46] : memref<512x128xbf16, #tpu.memory_space<vmem>>, vector<512x128xbf16>
    %cst_47 = arith.constant dense<0.000000e+00> : vector<8x128xf32>
    %110 = tpu.matmul %108, %109, %cst_47 {dimension_numbers = #tpu.dot_dimension_numbers<[1], [0], [0], [1], [0, 0, 1, 1], [], []>} : vector<8x512xbf16>, vector<512x128xbf16>, vector<8x128xf32> -> vector<8x128xf32>
    %c0_48 = arith.constant 0 : index
    %c0_49 = arith.constant 0 : index
    %111 = vector.load %arg14[%c0_48, %c0_49] : memref<1x128xf32, #tpu.memory_space<vmem>>, vector<1x128xf32>
    %112 = vector.shape_cast %111 : vector<1x128xf32> to vector<128xf32>
    %113 = vector.shape_cast %112 : vector<128xf32> to vector<1x128xf32>
    %114 = vector.broadcast %113 : vector<1x128xf32> to vector<8x128xf32>
    %115 = arith.addf %110, %114 : vector<8x128xf32>
    %c0_50 = arith.constant 0 : index
    %c0_51 = arith.constant 0 : index
    %c0_52 = arith.constant 0 : index
    %116 = vector.load %arg15[%c0_50, %c0_51, %c0_52] : memref<1x8x128xf32, #tpu.memory_space<vmem>>, vector<1x8x128xf32>
    %117 = vector.shape_cast %116 : vector<1x8x128xf32> to vector<8x128xf32>
    %118 = vector.shape_cast %115 : vector<8x128xf32> to vector<1x8x128xf32>
    tpu.vector_store %arg15[%c0_50, %c0_51, %c0_52], %118 {strides = array<i32>} : memref<1x8x128xf32, #tpu.memory_space<vmem>>, vector<1x8x128xf32>,
    return
  }
  func.func @transform_0(%arg0: i32, %arg1: i32) -> (i32, i32, i32) {
    %c0_i32 = arith.constant 0 : i32
    %c0_i32_0 = arith.constant 0 : i32
    %c0_i32_1 = arith.constant 0 : i32
    return %arg0, %c0_i32, %c0_i32_0 : i32, i32, i32
  }
  func.func @transform_1(%arg0: i32, %arg1: i32) -> (i32, i32, i32) {
    %c0_i32 = arith.constant 0 : i32
    %c0_i32_0 = arith.constant 0 : i32
    return %arg0, %arg1, %c0_i32 : i32, i32, i32
  }
  func.func @transform_2(%arg0: i32, %arg1: i32) -> (i32, i32) {
    %c0_i32 = arith.constant 0 : i32
    %c0_i32_0 = arith.constant 0 : i32
    %c0_i32_1 = arith.constant 0 : i32
    return %c0_i32, %c0_i32_0 : i32, i32
  }
  func.func @transform_3(%arg0: i32, %arg1: i32) -> (i32, i32) {
    %c0_i32 = arith.constant 0 : i32
    %c0_i32_0 = arith.constant 0 : i32
    %c0_i32_1 = arith.constant 0 : i32
    return %c0_i32, %c0_i32_0 : i32, i32
  }
  func.func @transform_4(%arg0: i32, %arg1: i32) -> (i32, i32) {
    %c0_i32 = arith.constant 0 : i32
    %c0_i32_0 = arith.constant 0 : i32
    %c0_i32_1 = arith.constant 0 : i32
    return %c0_i32, %c0_i32_0 : i32, i32
  }
  func.func @transform_5(%arg0: i32, %arg1: i32) -> (i32, i32) {
    %c0_i32 = arith.constant 0 : i32
    %c0_i32_0 = arith.constant 0 : i32
    %c0_i32_1 = arith.constant 0 : i32
    return %c0_i32, %c0_i32_0 : i32, i32
  }
  func.func @transform_6(%arg0: i32, %arg1: i32) -> (i32, i32) {
    %c0_i32 = arith.constant 0 : i32
    %c0_i32_0 = arith.constant 0 : i32
    %c0_i32_1 = arith.constant 0 : i32
    return %c0_i32, %c0_i32_0 : i32, i32
  }
  func.func @transform_7(%arg0: i32, %arg1: i32) -> (i32, i32) {
    %c0_i32 = arith.constant 0 : i32
    %c0_i32_0 = arith.constant 0 : i32
    %c0_i32_1 = arith.constant 0 : i32
    return %c0_i32, %c0_i32_0 : i32, i32
  }
  func.func @transform_8(%arg0: i32, %arg1: i32) -> (i32, i32) {
    %c0_i32 = arith.constant 0 : i32
    %c0_i32_0 = arith.constant 0 : i32
    %c0_i32_1 = arith.constant 0 : i32
    return %c0_i32, %c0_i32_0 : i32, i32
  }
  func.func @transform_9(%arg0: i32, %arg1: i32) -> (i32, i32) {
    %c0_i32 = arith.constant 0 : i32
    %c0_i32_0 = arith.constant 0 : i32
    %c0_i32_1 = arith.constant 0 : i32
    return %c0_i32, %c0_i32_0 : i32, i32
  }
  func.func @transform_10(%arg0: i32, %arg1: i32) -> (i32, i32) {
    %c0_i32 = arith.constant 0 : i32
    %c0_i32_0 = arith.constant 0 : i32
    %c0_i32_1 = arith.constant 0 : i32
    return %c0_i32, %c0_i32_0 : i32, i32
  }
  func.func @transform_11(%arg0: i32, %arg1: i32) -> (i32, i32) {
    %c0_i32 = arith.constant 0 : i32
    %c0_i32_0 = arith.constant 0 : i32
    %c0_i32_1 = arith.constant 0 : i32
    return %c0_i32, %c0_i32_0 : i32, i32
  }
  func.func @transform_12(%arg0: i32, %arg1: i32) -> (i32, i32) {
    %c0_i32 = arith.constant 0 : i32
    %c0_i32_0 = arith.constant 0 : i32
    %c0_i32_1 = arith.constant 0 : i32
    return %c0_i32, %c0_i32_0 : i32, i32
  }
  func.func @transform_13(%arg0: i32, %arg1: i32) -> (i32, i32, i32) {
    %c0_i32 = arith.constant 0 : i32
    %c0_i32_0 = arith.constant 0 : i32
    return %arg0, %arg1, %c0_i32 : i32, i32, i32
  }
  func.func @transform_14(%arg0: i32, %arg1: i32) -> (i32, i32, i32) {
    %c0_i32 = arith.constant 0 : i32
    %c0_i32_0 = arith.constant 0 : i32
    return %arg0, %arg1, %c0_i32 : i32, i32, i32
  }
}

</mosaic_0001>

<llo_original>
// kernel: tpu_custom_call.1
$region0: #{tpu_custom_call.1}
  #allocation0 [shape = 'u32[]', space=smem, size = 0x4, offset = 0x4, fixed_abs, tag = 'smem constant byte address 0x4 - core index']
  #allocation1 [shape = 'u32[144,128]{1,0:T(1,128)}', space=vmem, size = 0x12000, scoped, tag = 'internal scratch']
  #allocation2 [shape = 'f32[4,16,32]{2,1,0:T(8,128)}', space=vmem, size = 0x8000, scoped, tag = 'scratch operand']
  #allocation3 [shape = 'bf16[4,16,32]{2,1,0:T(16,128)(2,1)}', space=vmem, size = 0x4000, scoped, tag = 'scratch operand']
  #allocation4 [shape = 'bf16[4,16,32]{2,1,0:T(16,128)(2,1)}', space=vmem, size = 0x4000, scoped, tag = 'scratch operand']
  %s0 = inlined_call_operand.hbm [shape: f32[2,16,128], index: 0, kind: input, shape index: {}]
  %s1 = inlined_call_operand.hbm [shape: f32[2,16,512], index: 1, kind: input, shape index: {}]
  %s2 = inlined_call_operand.vmem [shape: f32[1,128], index: 2, kind: input, shape index: {}]
  %s3 = inlined_call_operand.vmem [shape: f32[1,128], index: 3, kind: input, shape index: {}]
  %s4 = inlined_call_operand.hbm [shape: bf16[128,384], index: 4, kind: input, shape index: {}]
  %s5 = inlined_call_operand.hbm [shape: bf16[128,128], index: 5, kind: input, shape index: {}]
  %s6 = inlined_call_operand.vmem [shape: f32[1,128], index: 6, kind: input, shape index: {}]
  %s7 = inlined_call_operand.vmem [shape: f32[1,128], index: 7, kind: input, shape index: {}]
  %s8 = inlined_call_operand.vmem [shape: f32[1,128], index: 8, kind: input, shape index: {}]
  %s9 = inlined_call_operand.hbm [shape: bf16[128,512], index: 9, kind: input, shape index: {}]
  %s10 = inlined_call_operand.vmem [shape: f32[1,512], index: 10, kind: input, shape index: {}]
  %s11 = inlined_call_operand.hbm [shape: bf16[512,128], index: 11, kind: input, shape index: {}]
  %s12 = inlined_call_operand.vmem [shape: f32[1,128], index: 12, kind: input, shape index: {}]
  %s13 = inlined_call_operand.hbm [shape: f32[2,16,128], index: 13, kind: output, shape index: {0}]
  %s14 = inlined_call_operand.hbm [shape: f32[2,16,512], index: 14, kind: output, shape index: {1}]
  %15 = xla_tuple %s13, %s14
  %s16 = sld [smem:[#allocation0]]
  $region121: #{tpu_custom_call.1} parent=0
    _
  %s18 = ssub.s32 1, %s16
  %s19 = scalar_select 0, %s18, %s16
  $region1: #{tpu_custom_call.1} parent=0
    #allocation5 [shape = 'u8[16384]{0}', space=vmem, size = 0x4000, scoped, tag = 'input window, operand 0']
    #allocation6 [shape = 's32[2]{0}', space=sflag, size = 0x8, scoped, tag = 'scoped memory for tpu_custom_call.1']
    #allocation7 [shape = 's32[2]{0}', space=sflag, size = 0x8, scoped, tag = 'scoped memory for tpu_custom_call.1']
    #allocation8 [shape = 'u8[32768]{0}', space=vmem, size = 0x8000, scoped, tag = 'input window, operand 1']
    #allocation9 [shape = 's32[2]{0}', space=sflag, size = 0x8, scoped, tag = 'scoped memory for tpu_custom_call.1']
    #allocation10 [shape = 'u8[98304]{0}', space=vmem, size = 0x18000, scoped, tag = 'input window, operand 4, single buffered']
    #allocation11 [shape = 'u8[32768]{0}', space=vmem, size = 0x8000, scoped, tag = 'input window, operand 5, single buffered']
    #allocation12 [shape = 's32[1]{0}', space=sflag, size = 0x4, scoped, tag = 'scoped memory for tpu_custom_call.1']
    #allocation13 [shape = 'u8[131072]{0}', space=vmem, size = 0x20000, scoped, tag = 'input window, operand 9, single buffered']
    #allocation14 [shape = 'u8[131072]{0}', space=vmem, size = 0x20000, scoped, tag = 'input window, operand 11, single buffered']
    #allocation15 [shape = 's32[1]{0}', space=sflag, size = 0x4, scoped, tag = 'scoped memory for tpu_custom_call.1']
    #allocation16 [shape = 'u8[8192]{0}', space=vmem, size = 0x2000, scoped, tag = 'output window, operand 0']
    #allocation17 [shape = 'u8[32768]{0}', space=vmem, size = 0x8000, scoped, tag = 'output window, operand 1']
    #allocation18 [shape = 's32[2]{0}', space=sflag, size = 0x8, scoped, tag = 'scoped memory for tpu_custom_call.1']
    %20 = vsyncpa [#allocation6], 0
    %s21 = scalar_lea.sflag [#allocation6], 1
    %22 = vsyncpa %s21, 0
    %23 = vsyncpa [#allocation9], 0
    %s24 = scalar_lea.sflag [#allocation9], 1
    %25 = vsyncpa %s24, 0
    %26 = vsyncpa [#allocation12], 0
    %27 = vsyncpa [#allocation15], 0
    %28 = vsyncpa [#allocation7], 0
    %s29 = scalar_lea.sflag [#allocation7], 1
    %30 = vsyncpa %s29, 0
    %31 = vsyncpa [#allocation18], 0
    %s32 = scalar_lea.sflag [#allocation18], 1
    %33 = vsyncpa %s32, 0
    loop: start=0, step=1, limit=6
    $region2: #{tpu_custom_call.1} parent=1 // loop_pre_header
      _
    $region3: #{tpu_custom_call.1} parent=1 // loop_header
      %s35 = sphi 0, %s39
      %p36 = scmp.ge.s32.totalorder %s35, 6
      %s42 = sphi 0, %s54
      %s43 = sphi 0, %s50
      %s44 = sphi 0, %s42
      %s45 = sphi 0, %s43
      %s46 = sphi 0, %s44
      %s47 = sphi 0, %s45
      %s57 = sphi 0, %s59
      %s60 = sphi 0, %s57
      %s61 = sphi 0, %s60
      %s77 = sphi 0, %s61
      %s85 = sphi 0, %s87
      %s88 = sphi 0, %s85
      %s89 = sphi 0, %s88
      %s105 = sphi 0, %s89
      %s109 = sphi 0, %s109
      %s111 = sphi 0, %s109
      %s112 = sphi 0, %s111
      %s126 = sphi 0, %s112
      %s130 = sphi 0, %s130
      %s132 = sphi 0, %s130
      %s133 = sphi 0, %s132
      %s147 = sphi 0, %s133
      %s151 = sphi 0, %s151
      %s153 = sphi 0, %s151
      %s154 = sphi 0, %s153
      %s168 = sphi 0, %s154
      %s172 = sphi 0, %s172
      %s174 = sphi 0, %s172
      %s175 = sphi 0, %s174
      %s189 = sphi 0, %s175
      %s193 = sphi 0, %s193
      %s195 = sphi 0, %s193
      %s196 = sphi 0, %s195
      %s210 = sphi 0, %s196
      %s214 = sphi 0, %s214
      %s216 = sphi 0, %s214
      %s217 = sphi 0, %s216
      %s231 = sphi 0, %s217
      %s235 = sphi 0, %s235
      %s237 = sphi 0, %s235
      %s238 = sphi 0, %s237
      %s252 = sphi 0, %s238
      %s256 = sphi 0, %s256
      %s258 = sphi 0, %s256
      %s259 = sphi 0, %s258
      %s273 = sphi 0, %s259
      %s277 = sphi 0, %s277
      %s279 = sphi 0, %s277
      %s280 = sphi 0, %s279
      %s294 = sphi 0, %s280
      %s298 = sphi 0, %s298
      %s300 = sphi 0, %s298
      %s301 = sphi 0, %s300
      %s315 = sphi 0, %s301
      %s319 = sphi 0, %s319
      %s321 = sphi 0, %s319
      %s322 = sphi 0, %s321
      %s336 = sphi 0, %s322
      %s344 = sphi 0, %s346
      %s347 = sphi 0, %s344
      %s348 = sphi 0, %s347
      %s364 = sphi 0, %s348
      %s372 = sphi 0, %s374
      %s375 = sphi 0, %s372
      %s376 = sphi 0, %s375
      %s392 = sphi 0, %s376
    $region4: #{tpu_custom_call.1} parent=1 // loop_header_branch
      %38 = sbr.rel (%p36) target = $region8
    $region5: #{tpu_custom_call.1} parent=1 // loop_body
      %s40 = ssub.s32 %s35, 1
      %s41 = ssub.s32 %s35, 2
      %s48 = sadd.s32 1, %s43
      %p49 = scmp.ge.s32.totalorder %s48, 2
      %s50 = scalar_select %p49, 0, %s48
      %s51 = sadd.s32 1, %s42
      %s52 = scalar_select %p49, %s51, %s42
      %p53 = scmp.ge.s32.totalorder %s52, 2
      %s54 = scalar_select %p53, 0, %s52
      %s55 = ssub.s32 %s42, %s54
      %p56 = scmp.eq.s32.totalorder %s55, 0
      %s58 = sadd.s32 %s57, 1
      %s59 = scalar_select %p56, %s57, %s58
      %p62 = pneg %p56
      %p63 = scmp.eq.s32.totalorder %s35, 3
      %p64 = por %p62, %p63
      %p65 = scmp.ne.s32.totalorder %s57, %s60
      %p66 = scmp.eq.s32.totalorder %s35, 0
      %p67 = por %p65, %p66
      %p68 = scmp.ne.s32.totalorder %s57, %s60
      %p69 = scmp.eq.s32.totalorder %s40, 3
      %p70 = por %p68, %p69
      %p71 = scmp.ne.s32.totalorder %s60, %s61
      %p72 = scmp.eq.s32.totalorder %s40, 0
      %p73 = por %p71, %p72
      %p74 = scmp.ne.s32.totalorder %s60, %s61
      %p75 = scmp.eq.s32.totalorder %s41, 3
      %p76 = por %p74, %p75
      %p78 = scmp.ne.s32.totalorder %s61, %s77
      %p79 = scmp.eq.s32.totalorder %s41, 0
      %p80 = por %p78, %p79
      %s81 = ssub.s32 %s42, %s54
      %s82 = ssub.s32 %s43, %s50
      %s83 = sor.u32 %s81, %s82
      %p84 = scmp.eq.s32.totalorder %s83, 0
      %s86 = sadd.s32 %s85, 1
      %s87 = scalar_select %p84, %s85, %s86
      %p90 = pneg %p84
      %p91 = scmp.eq.s32.totalorder %s35, 3
      %p92 = por %p90, %p91
      %p93 = scmp.ne.s32.totalorder %s85, %s88
      %p94 = scmp.eq.s32.totalorder %s35, 0
      %p95 = por %p93, %p94
      %p96 = scmp.ne.s32.totalorder %s85, %s88
      %p97 = scmp.eq.s32.totalorder %s40, 3
      %p98 = por %p96, %p97
      %p99 = scmp.ne.s32.totalorder %s88, %s89
      %p100 = scmp.eq.s32.totalorder %s40, 0
      %p101 = por %p99, %p100
      %p102 = scmp.ne.s32.totalorder %s88, %s89
      %p103 = scmp.eq.s32.totalorder %s41, 3
      %p104 = por %p102, %p103
      %p106 = scmp.ne.s32.totalorder %s89, %s105
      %p107 = scmp.eq.s32.totalorder %s41, 0
      %p108 = por %p106, %p107
      %s110 = sadd.s32 %s109, 1
      %p113 = scmp.eq.s32.totalorder %s35, 3
      %p114 = scmp.ne.s32.totalorder %s109, %s111
      %p115 = scmp.eq.s32.totalorder %s35, 0
      %p116 = por %p114, %p115
      %p117 = scmp.ne.s32.totalorder %s109, %s111
      %p118 = scmp.eq.s32.totalorder %s40, 3
      %p119 = por %p117, %p118
      %p120 = scmp.ne.s32.totalorder %s111, %s112
      %p121 = scmp.eq.s32.totalorder %s40, 0
      %p122 = por %p120, %p121
      %p123 = scmp.ne.s32.totalorder %s111, %s112
      %p124 = scmp.eq.s32.totalorder %s41, 3
      %p125 = por %p123, %p124
      %p127 = scmp.ne.s32.totalorder %s112, %s126
      %p128 = scmp.eq.s32.totalorder %s41, 0
      %p129 = por %p127, %p128
      %s131 = sadd.s32 %s130, 1
      %p134 = scmp.eq.s32.totalorder %s35, 3
      %p135 = scmp.ne.s32.totalorder %s130, %s132
      %p136 = scmp.eq.s32.totalorder %s35, 0
      %p137 = por %p135, %p136
      %p138 = scmp.ne.s32.totalorder %s130, %s132
      %p139 = scmp.eq.s32.totalorder %s40, 3
      %p140 = por %p138, %p139
      %p141 = scmp.ne.s32.totalorder %s132, %s133
      %p142 = scmp.eq.s32.totalorder %s40, 0
      %p143 = por %p141, %p142
      %p144 = scmp.ne.s32.totalorder %s132, %s133
      %p145 = scmp.eq.s32.totalorder %s41, 3
      %p146 = por %p144, %p145
      %p148 = scmp.ne.s32.totalorder %s133, %s147
      %p149 = scmp.eq.s32.totalorder %s41, 0
      %p150 = por %p148, %p149
      %s152 = sadd.s32 %s151, 1
      %p155 = scmp.eq.s32.totalorder %s35, 3
      %p156 = scmp.ne.s32.totalorder %s151, %s153
      %p157 = scmp.eq.s32.totalorder %s35, 0
      %p158 = por %p156, %p157
      %p159 = scmp.ne.s32.totalorder %s151, %s153
      %p160 = scmp.eq.s32.totalorder %s40, 3
      %p161 = por %p159, %p160
      %p162 = scmp.ne.s32.totalorder %s153, %s154
      %p163 = scmp.eq.s32.totalorder %s40, 0
      %p164 = por %p162, %p163
      %p165 = scmp.ne.s32.totalorder %s153, %s154
      %p166 = scmp.eq.s32.totalorder %s41, 3
      %p167 = por %p165, %p166
      %p169 = scmp.ne.s32.totalorder %s154, %s168
      %p170 = scmp.eq.s32.totalorder %s41, 0
      %p171 = por %p169, %p170
      %s173 = sadd.s32 %s172, 1
      %p176 = scmp.eq.s32.totalorder %s35, 3
      %p177 = scmp.ne.s32.totalorder %s172, %s174
      %p178 = scmp.eq.s32.totalorder %s35, 0
      %p179 = por %p177, %p178
      %p180 = scmp.ne.s32.totalorder %s172, %s174
      %p181 = scmp.eq.s32.totalorder %s40, 3
      %p182 = por %p180, %p181
      %p183 = scmp.ne.s32.totalorder %s174, %s175
      %p184 = scmp.eq.s32.totalorder %s40, 0
      %p185 = por %p183, %p184
      %p186 = scmp.ne.s32.totalorder %s174, %s175
      %p187 = scmp.eq.s32.totalorder %s41, 3
      %p188 = por %p186, %p187
      %p190 = scmp.ne.s32.totalorder %s175, %s189
      %p191 = scmp.eq.s32.totalorder %s41, 0
      %p192 = por %p190, %p191
      %s194 = sadd.s32 %s193, 1
      %p197 = scmp.eq.s32.totalorder %s35, 3
      %p198 = scmp.ne.s32.totalorder %s193, %s195
      %p199 = scmp.eq.s32.totalorder %s35, 0
      %p200 = por %p198, %p199
      %p201 = scmp.ne.s32.totalorder %s193, %s195
      %p202 = scmp.eq.s32.totalorder %s40, 3
      %p203 = por %p201, %p202
      %p204 = scmp.ne.s32.totalorder %s195, %s196
      %p205 = scmp.eq.s32.totalorder %s40, 0
      %p206 = por %p204, %p205
      %p207 = scmp.ne.s32.totalorder %s195, %s196
      %p208 = scmp.eq.s32.totalorder %s41, 3
      %p209 = por %p207, %p208
      %p211 = scmp.ne.s32.totalorder %s196, %s210
      %p212 = scmp.eq.s32.totalorder %s41, 0
      %p213 = por %p211, %p212
      %s215 = sadd.s32 %s214, 1
      %p218 = scmp.eq.s32.totalorder %s35, 3
      %p219 = scmp.ne.s32.totalorder %s214, %s216
      %p220 = scmp.eq.s32.totalorder %s35, 0
      %p221 = por %p219, %p220
      %p222 = scmp.ne.s32.totalorder %s214, %s216
      %p223 = scmp.eq.s32.totalorder %s40, 3
      %p224 = por %p222, %p223
      %p225 = scmp.ne.s32.totalorder %s216, %s217
      %p226 = scmp.eq.s32.totalorder %s40, 0
      %p227 = por %p225, %p226
      %p228 = scmp.ne.s32.totalorder %s216, %s217
      %p229 = scmp.eq.s32.totalorder %s41, 3
      %p230 = por %p228, %p229
      %p232 = scmp.ne.s32.totalorder %s217, %s231
      %p233 = scmp.eq.s32.totalorder %s41, 0
      %p234 = por %p232, %p233
      %s236 = sadd.s32 %s235, 1
      %p239 = scmp.eq.s32.totalorder %s35, 3
      %p240 = scmp.ne.s32.totalorder %s235, %s237
      %p241 = scmp.eq.s32.totalorder %s35, 0
      %p242 = por %p240, %p241
      %p243 = scmp.ne.s32.totalorder %s235, %s237
      %p244 = scmp.eq.s32.totalorder %s40, 3
      %p245 = por %p243, %p244
      %p246 = scmp.ne.s32.totalorder %s237, %s238
      %p247 = scmp.eq.s32.totalorder %s40, 0
      %p248 = por %p246, %p247
      %p249 = scmp.ne.s32.totalorder %s237, %s238
      %p250 = scmp.eq.s32.totalorder %s41, 3
      %p251 = por %p249, %p250
      %p253 = scmp.ne.s32.totalorder %s238, %s252
      %p254 = scmp.eq.s32.totalorder %s41, 0
      %p255 = por %p253, %p254
      %s257 = sadd.s32 %s256, 1
      %p260 = scmp.eq.s32.totalorder %s35, 3
      %p261 = scmp.ne.s32.totalorder %s256, %s258
      %p262 = scmp.eq.s32.totalorder %s35, 0
      %p263 = por %p261, %p262
      %p264 = scmp.ne.s32.totalorder %s256, %s258
      %p265 = scmp.eq.s32.totalorder %s40, 3
      %p266 = por %p264, %p265
      %p267 = scmp.ne.s32.totalorder %s258, %s259
      %p268 = scmp.eq.s32.totalorder %s40, 0
      %p269 = por %p267, %p268
      %p270 = scmp.ne.s32.totalorder %s258, %s259
      %p271 = scmp.eq.s32.totalorder %s41, 3
      %p272 = por %p270, %p271
      %p274 = scmp.ne.s32.totalorder %s259, %s273
      %p275 = scmp.eq.s32.totalorder %s41, 0
      %p276 = por %p274, %p275
      %s278 = sadd.s32 %s277, 1
      %p281 = scmp.eq.s32.totalorder %s35, 3
      %p282 = scmp.ne.s32.totalorder %s277, %s279
      %p283 = scmp.eq.s32.totalorder %s35, 0
      %p284 = por %p282, %p283
      %p285 = scmp.ne.s32.totalorder %s277, %s279
      %p286 = scmp.eq.s32.totalorder %s40, 3
      %p287 = por %p285, %p286
      %p288 = scmp.ne.s32.totalorder %s279, %s280
      %p289 = scmp.eq.s32.totalorder %s40, 0
      %p290 = por %p288, %p289
      %p291 = scmp.ne.s32.totalorder %s279, %s280
      %p292 = scmp.eq.s32.totalorder %s41, 3
      %p293 = por %p291, %p292
      %p295 = scmp.ne.s32.totalorder %s280, %s294
      %p296 = scmp.eq.s32.totalorder %s41, 0
      %p297 = por %p295, %p296
      %s299 = sadd.s32 %s298, 1
      %p302 = scmp.eq.s32.totalorder %s35, 3
      %p303 = scmp.ne.s32.totalorder %s298, %s300
      %p304 = scmp.eq.s32.totalorder %s35, 0
      %p305 = por %p303, %p304
      %p306 = scmp.ne.s32.totalorder %s298, %s300
      %p307 = scmp.eq.s32.totalorder %s40, 3
      %p308 = por %p306, %p307
      %p309 = scmp.ne.s32.totalorder %s300, %s301
      %p310 = scmp.eq.s32.totalorder %s40, 0
      %p311 = por %p309, %p310
      %p312 = scmp.ne.s32.totalorder %s300, %s301
      %p313 = scmp.eq.s32.totalorder %s41, 3
      %p314 = por %p312, %p313
      %p316 = scmp.ne.s32.totalorder %s301, %s315
      %p317 = scmp.eq.s32.totalorder %s41, 0
      %p318 = por %p316, %p317
      %s320 = sadd.s32 %s319, 1
      %p323 = scmp.eq.s32.totalorder %s35, 3
      %p324 = scmp.ne.s32.totalorder %s319, %s321
      %p325 = scmp.eq.s32.totalorder %s35, 0
      %p326 = por %p324, %p325
      %p327 = scmp.ne.s32.totalorder %s319, %s321
      %p328 = scmp.eq.s32.totalorder %s40, 3
      %p329 = por %p327, %p328
      %p330 = scmp.ne.s32.totalorder %s321, %s322
      %p331 = scmp.eq.s32.totalorder %s40, 0
      %p332 = por %p330, %p331
      %p333 = scmp.ne.s32.totalorder %s321, %s322
      %p334 = scmp.eq.s32.totalorder %s41, 3
      %p335 = por %p333, %p334
      %p337 = scmp.ne.s32.totalorder %s322, %s336
      %p338 = scmp.eq.s32.totalorder %s41, 0
      %p339 = por %p337, %p338
      %s340 = ssub.s32 %s42, %s54
      %s341 = ssub.s32 %s43, %s50
      %s342 = sor.u32 %s340, %s341
      %p343 = scmp.eq.s32.totalorder %s342, 0
      %s345 = sadd.s32 %s344, 1
      %s346 = scalar_select %p343, %s344, %s345
      %p349 = pneg %p343
      %p350 = scmp.eq.s32.totalorder %s35, 3
      %p351 = por %p349, %p350
      %p352 = scmp.ne.s32.totalorder %s344, %s347
      %p353 = scmp.eq.s32.totalorder %s35, 0
      %p354 = por %p352, %p353
      %p355 = scmp.ne.s32.totalorder %s344, %s347
      %p356 = scmp.eq.s32.totalorder %s40, 3
      %p357 = por %p355, %p356
      %p358 = scmp.ne.s32.totalorder %s347, %s348
      %p359 = scmp.eq.s32.totalorder %s40, 0
      %p360 = por %p358, %p359
      %p361 = scmp.ne.s32.totalorder %s347, %s348
      %p362 = scmp.eq.s32.totalorder %s41, 3
      %p363 = por %p361, %p362
      %p365 = scmp.ne.s32.totalorder %s348, %s364
      %p366 = scmp.eq.s32.totalorder %s41, 0
      %p367 = por %p365, %p366
      %s368 = ssub.s32 %s42, %s54
      %s369 = ssub.s32 %s43, %s50
      %s370 = sor.u32 %s368, %s369
      %p371 = scmp.eq.s32.totalorder %s370, 0
      %s373 = sadd.s32 %s372, 1
      %s374 = scalar_select %p371, %s372, %s373
      %p377 = pneg %p371
      %p378 = scmp.eq.s32.totalorder %s35, 3
      %p379 = por %p377, %p378
      %p380 = scmp.ne.s32.totalorder %s372, %s375
      %p381 = scmp.eq.s32.totalorder %s35, 0
      %p382 = por %p380, %p381
      %p383 = scmp.ne.s32.totalorder %s372, %s375
      %p384 = scmp.eq.s32.totalorder %s40, 3
      %p385 = por %p383, %p384
      %p386 = scmp.ne.s32.totalorder %s375, %s376
      %p387 = scmp.eq.s32.totalorder %s40, 0
      %p388 = por %p386, %p387
      %p389 = scmp.ne.s32.totalorder %s375, %s376
      %p390 = scmp.eq.s32.totalorder %s41, 3
      %p391 = por %p389, %p390
      %p393 = scmp.ne.s32.totalorder %s376, %s392
      %p394 = scmp.eq.s32.totalorder %s41, 0
      %p395 = por %p393, %p394
      %p396 = scmp.le.s32.totalorder 1, %s35
      %p397 = scmp.lt.s32.totalorder %s35, 5
      %p398 = pnand %p396, %p397
      %p399 = pneg %p398
      // Predicated region
      $region9: #{tpu_custom_call.1} parent=5 // pred_check
        _
      $region10: #{tpu_custom_call.1} parent=5 // pred_check_branch
        %401 = sbr.rel (%p398) target = $region12
      $region11: #{tpu_custom_call.1} parent=5 // pred_region
        %s402 = ssub.s32 %s35, 1
        // Predicated region
        $region13: #{tpu_custom_call.1} parent=11 // pred_check
          %p403 = pneg %p122
        $region14: #{tpu_custom_call.1} parent=11 // pred_check_branch
          %405 = sbr.rel (%p403) target = $region16
        $region15: #{tpu_custom_call.1} parent=11 // pred_region
          _
        $region16: #{tpu_custom_call.1} parent=11 // pred_fallthru
          _
        // Predicated region
        $region17: #{tpu_custom_call.1} parent=11 // pred_check
          %p406 = pneg %p143
        $region18: #{tpu_custom_call.1} parent=11 // pred_check_branch
          %408 = sbr.rel (%p406) target = $region20
        $region19: #{tpu_custom_call.1} parent=11 // pred_region
          _
        $region20: #{tpu_custom_call.1} parent=11 // pred_fallthru
          _
        // Predicated region
        $region21: #{tpu_custom_call.1} parent=11 // pred_check
          %p409 = pneg %p164
        $region22: #{tpu_custom_call.1} parent=11 // pred_check_branch
          %411 = sbr.rel (%p409) target = $region24
        $region23: #{tpu_custom_call.1} parent=11 // pred_region
          %s413 = ssub.s32 3072, 3072
          %414 = vsyncadd [#allocation9], %s413
          %s415 = sshll.u32 [#allocation10], 4
          %s416 = int_to_ptr.vmem [resolvable:$true] %s415
          %421 = dma.hbm_to_vmem [thread:$0]  %s4, 3072, %s416, [#allocation9], 192, 192, 12
        $region24: #{tpu_custom_call.1} parent=11 // pred_fallthru
          _
        // Predicated region
        $region25: #{tpu_custom_call.1} parent=11 // pred_check
          %p422 = pneg %p185
        $region26: #{tpu_custom_call.1} parent=11 // pred_check_branch
          %424 = sbr.rel (%p422) target = $region28
        $region27: #{tpu_custom_call.1} parent=11 // pred_region
          %s426 = ssub.s32 1024, 1024
          %427 = vsyncadd [#allocation12], %s426
          %s428 = sshll.u32 [#allocation11], 4
          %s429 = int_to_ptr.vmem [resolvable:$true] %s428
          %434 = dma.hbm_to_vmem [thread:$0]  %s5, 1024, %s429, [#allocation12], 64, 64, 4
        $region28: #{tpu_custom_call.1} parent=11 // pred_fallthru
          _
        // Predicated region
        $region29: #{tpu_custom_call.1} parent=11 // pred_check
          %p435 = pneg %p206
        $region30: #{tpu_custom_call.1} parent=11 // pred_check_branch
          %437 = sbr.rel (%p435) target = $region32
        $region31: #{tpu_custom_call.1} parent=11 // pred_region
          _
        $region32: #{tpu_custom_call.1} parent=11 // pred_fallthru
          _
        // Predicated region
        $region33: #{tpu_custom_call.1} parent=11 // pred_check
          %p438 = pneg %p227
        $region34: #{tpu_custom_call.1} parent=11 // pred_check_branch
          %440 = sbr.rel (%p438) target = $region36
        $region35: #{tpu_custom_call.1} parent=11 // pred_region
          _
        $region36: #{tpu_custom_call.1} parent=11 // pred_fallthru
          _
        // Predicated region
        $region37: #{tpu_custom_call.1} parent=11 // pred_check
          %p441 = pneg %p248
        $region38: #{tpu_custom_call.1} parent=11 // pred_check_branch
          %443 = sbr.rel (%p441) target = $region40
        $region39: #{tpu_custom_call.1} parent=11 // pred_region
          _
        $region40: #{tpu_custom_call.1} parent=11 // pred_fallthru
          _
        // Predicated region
        $region41: #{tpu_custom_call.1} parent=11 // pred_check
          %p444 = pneg %p269
        $region42: #{tpu_custom_call.1} parent=11 // pred_check_branch
          %446 = sbr.rel (%p444) target = $region44
        $region43: #{tpu_custom_call.1} parent=11 // pred_region
          %s448 = ssub.s32 4096, 4096
          %449 = vsyncadd [#allocation12], %s448
          %s450 = sshll.u32 [#allocation13], 4
          %s451 = int_to_ptr.vmem [resolvable:$true] %s450
          %456 = dma.hbm_to_vmem [thread:$0]  %s9, 4096, %s451, [#allocation12], 256, 256, 16
        $region44: #{tpu_custom_call.1} parent=11 // pred_fallthru
          _
        // Predicated region
        $region45: #{tpu_custom_call.1} parent=11 // pred_check
          %p457 = pneg %p290
        $region46: #{tpu_custom_call.1} parent=11 // pred_check_branch
          %459 = sbr.rel (%p457) target = $region48
        $region47: #{tpu_custom_call.1} parent=11 // pred_region
          _
        $region48: #{tpu_custom_call.1} parent=11 // pred_fallthru
          _
        // Predicated region
        $region49: #{tpu_custom_call.1} parent=11 // pred_check
          %p460 = pneg %p311
        $region50: #{tpu_custom_call.1} parent=11 // pred_check_branch
          %462 = sbr.rel (%p460) target = $region52
        $region51: #{tpu_custom_call.1} parent=11 // pred_region
          %s464 = ssub.s32 4096, 4096
          %465 = vsyncadd [#allocation15], %s464
          %s466 = sshll.u32 [#allocation14], 4
          %s467 = int_to_ptr.vmem [resolvable:$true] %s466
          %472 = dma.hbm_to_vmem [thread:$0]  %s11, 4096, %s467, [#allocation15], 64, 64, 4
        $region52: #{tpu_custom_call.1} parent=11 // pred_fallthru
          _
        // Predicated region
        $region53: #{tpu_custom_call.1} parent=11 // pred_check
          %p473 = pneg %p332
        $region54: #{tpu_custom_call.1} parent=11 // pred_check_branch
          %475 = sbr.rel (%p473) target = $region56
        $region55: #{tpu_custom_call.1} parent=11 // pred_region
          _
        $region56: #{tpu_custom_call.1} parent=11 // pred_fallthru
          _
      $region12: #{tpu_custom_call.1} parent=5 // pred_fallthru
        _
      %p476 = scmp.lt.s32.totalorder %s35, 4
      // Predicated region
      $region57: #{tpu_custom_call.1} parent=5 // pred_check
        %p477 = pneg %p476
      $region58: #{tpu_custom_call.1} parent=5 // pred_check_branch
        %479 = sbr.rel (%p477) target = $region60
      $region59: #{tpu_custom_call.1} parent=5 // pred_region
        // Predicated region
        $region61: #{tpu_custom_call.1} parent=59 // pred_check
          %p480 = pneg %p67
        $region62: #{tpu_custom_call.1} parent=59 // pred_check_branch
          %482 = sbr.rel (%p480) target = $region64
        $region63: #{tpu_custom_call.1} parent=59 // pred_region
          %s483 = sand.u32 %s57, 1
          %s484 = scalar_lea.sflag [#allocation6], %s483
          %s485 = sand.u32 %s57, 1
          %s486 = smul.addr %s485, 16
          %s487 = scalar_lea.vmem [#allocation5], %s486
          %s489 = ssub.s32 256, 256
          %490 = vsyncadd %s484, %s489
          %s491 = smul.addr %s42, 2
          %s492 = smul.addr %s491, 128
          %s493 = scalar_lea.hbm %s0, %s492
          %s494 = sshll.u32 %s487, 4
          %s495 = int_to_ptr.vmem [resolvable:$true] %s494
          %500 = dma.hbm_to_vmem [thread:$0]  %s493, 256, %s495, %s484, 128, 128, 8
        $region64: #{tpu_custom_call.1} parent=59 // pred_fallthru
          _
        // Predicated region
        $region65: #{tpu_custom_call.1} parent=59 // pred_check
          %p501 = pneg %p95
        $region66: #{tpu_custom_call.1} parent=59 // pred_check_branch
          %503 = sbr.rel (%p501) target = $region68
        $region67: #{tpu_custom_call.1} parent=59 // pred_region
          %s504 = sand.u32 %s35, 1
          %s505 = scalar_lea.sflag [#allocation9], %s504
          %s506 = sand.u32 %s85, 1
          %s507 = smul.addr %s506, 32
          %s508 = scalar_lea.vmem [#allocation8], %s507
          %s510 = ssub.s32 512, 512
          %511 = vsyncadd %s505, %s510
          %s512 = smul.addr %s43, 4
          %s513 = smul.addr %s42, 8
          %s514 = sadd.s32 %s512, %s513
          %s515 = smul.addr %s514, 128
          %s516 = scalar_lea.hbm %s1, %s515
          %s518 = sshll.u32 %s508, 4
          %s519 = int_to_ptr.vmem [resolvable:$true] %s518
          %521 = dma.hbm_to_vmem [thread:$0]  %s516, 512, %s519, %s505
        $region68: #{tpu_custom_call.1} parent=59 // pred_fallthru
          _
      $region60: #{tpu_custom_call.1} parent=5 // pred_fallthru
        _
      %p522 = scmp.le.s32.totalorder 1, %s35
      %p523 = scmp.lt.s32.totalorder %s35, 5
      %p524 = pnand %p522, %p523
      %p525 = pneg %p524
      // Predicated region
      $region69: #{tpu_custom_call.1} parent=5 // pred_check
        _
      $region70: #{tpu_custom_call.1} parent=5 // pred_check_branch
        %527 = sbr.rel (%p524) target = $region72
      $region71: #{tpu_custom_call.1} parent=5 // pred_region
        %s528 = ssub.s32 %s35, 1
        %s529 = sand.u32 %s60, 1
        %s530 = scalar_lea.sflag [#allocation6], %s529
        %s531 = sand.u32 %s60, 1
        %s532 = smul.addr %s531, 16
        %s533 = scalar_lea.vmem [#allocation5], %s532
        // Predicated region
        $region73: #{tpu_custom_call.1} parent=71 // pred_check
          %p534 = pneg %p73
        $region74: #{tpu_custom_call.1} parent=71 // pred_check_branch
          %536 = sbr.rel (%p534) target = $region76
        $region75: #{tpu_custom_call.1} parent=71 // pred_region
          %537 = dma.done %s530, 256
        $region76: #{tpu_custom_call.1} parent=71 // pred_fallthru
          _
        %s538 = sand.u32 %s40, 1
        %s539 = scalar_lea.sflag [#allocation9], %s538
        %s540 = sand.u32 %s88, 1
        %s541 = smul.addr %s540, 32
        %s542 = scalar_lea.vmem [#allocation8], %s541
        // Predicated region
        $region77: #{tpu_custom_call.1} parent=71 // pred_check
          %p543 = pneg %p101
        $region78: #{tpu_custom_call.1} parent=71 // pred_check_branch
          %545 = sbr.rel (%p543) target = $region80
        $region79: #{tpu_custom_call.1} parent=71 // pred_region
          %546 = dma.done %s539, 512
        $region80: #{tpu_custom_call.1} parent=71 // pred_fallthru
          _
        // Predicated region
        $region81: #{tpu_custom_call.1} parent=71 // pred_check
          %p547 = pneg %p164
        $region82: #{tpu_custom_call.1} parent=71 // pred_check_branch
          %549 = sbr.rel (%p547) target = $region84
        $region83: #{tpu_custom_call.1} parent=71 // pred_region
          %550 = dma.done [#allocation9], 3072
        $region84: #{tpu_custom_call.1} parent=71 // pred_fallthru
          _
        // Predicated region
        $region85: #{tpu_custom_call.1} parent=71 // pred_check
          %p551 = pneg %p185
        $region86: #{tpu_custom_call.1} parent=71 // pred_check_branch
          %553 = sbr.rel (%p551) target = $region88
        $region87: #{tpu_custom_call.1} parent=71 // pred_region
          %554 = dma.done [#allocation12], 1024
        $region88: #{tpu_custom_call.1} parent=71 // pred_fallthru
          _
        // Predicated region
        $region89: #{tpu_custom_call.1} parent=71 // pred_check
          %p555 = pneg %p269
        $region90: #{tpu_custom_call.1} parent=71 // pred_check_branch
          %557 = sbr.rel (%p555) target = $region92
        $region91: #{tpu_custom_call.1} parent=71 // pred_region
          %558 = dma.done [#allocation12], 4096
        $region92: #{tpu_custom_call.1} parent=71 // pred_fallthru
          _
        // Predicated region
        $region93: #{tpu_custom_call.1} parent=71 // pred_check
          %p559 = pneg %p311
        $region94: #{tpu_custom_call.1} parent=71 // pred_check_branch
          %561 = sbr.rel (%p559) target = $region96
        $region95: #{tpu_custom_call.1} parent=71 // pred_region
          %562 = dma.done [#allocation15], 4096
        $region96: #{tpu_custom_call.1} parent=71 // pred_fallthru
          _
        %s563 = sand.u32 %s60, 1
        %s564 = scalar_lea.sflag [#allocation6], %s563
        %s565 = sand.u32 %s60, 1
        %s566 = smul.addr %s565, 16
        %s567 = scalar_lea.vmem [#allocation5], %s566
        %p568 = pneg %p73
        %p569 = pneg %p70
        %s570 = sand.u32 %s40, 1
        %s571 = scalar_lea.sflag [#allocation9], %s570
        %s572 = sand.u32 %s88, 1
        %s573 = smul.addr %s572, 32
        %s574 = scalar_lea.vmem [#allocation8], %s573
        %p575 = pneg %p101
        %p576 = pneg %p98
        %p577 = pneg %p122
        %p578 = pneg %p119
        %p579 = pneg %p143
        %p580 = pneg %p140
        %p581 = pneg %p164
        %p582 = pneg %p161
        %p583 = pneg %p185
        %p584 = pneg %p182
        %p585 = pneg %p206
        %p586 = pneg %p203
        %p587 = pneg %p227
        %p588 = pneg %p224
        %p589 = pneg %p248
        %p590 = pneg %p245
        %p591 = pneg %p269
        %p592 = pneg %p266
        %p593 = pneg %p290
        %p594 = pneg %p287
        %p595 = pneg %p311
        %p596 = pneg %p308
        %p597 = pneg %p332
        %p598 = pneg %p329
        %p599 = pneg %p360
        %p600 = pneg %p357
        %s601 = sand.u32 %s347, 1
        %s602 = scalar_lea.sflag [#allocation7], %s601
        %s603 = sand.u32 %s347, 1
        %s604 = smul.addr %s603, 8
        %s605 = scalar_lea.vmem [#allocation16], %s604
        %p606 = pneg %p388
        %p607 = pneg %p385
        %s608 = sand.u32 %s375, 1
        %s609 = scalar_lea.sflag [#allocation18], %s608
        %s610 = sand.u32 %s375, 1
        %s611 = smul.addr %s610, 32
        %s612 = scalar_lea.vmem [#allocation17], %s611
        %p614 = scmp.eq.s32.totalorder %s45, 0
        // Predicated region
        $region97: #{tpu_custom_call.1} parent=71 // pred_check
          %p615 = pneg %p614
        $region98: #{tpu_custom_call.1} parent=71 // pred_check_branch
          %617 = sbr.rel (%p615) target = $region100
        $region99: #{tpu_custom_call.1} parent=71 // pred_region
          %v618 = vld [vmem:[%s533] sm:$0xff]
          %v619 = vld [vmem:[%s533 + $0x8] sm:$0xff]
          %v620 = vld [vmem:[%s2] sm:$0x1]
          %v621 = vld [vmem:[%s3] sm:$0x1]
          %622 = vadd.xlane.f32.xlu0 %v618
          %v623 = vpop.xlane.xlu0 %622
          %624 = vadd.xlane.f32.xlu0 %v619
          %v625 = vpop.xlane.xlu0 %624
          %v626 = vrcp.pop 128.0
          %v627 = vmul.f32 %v623, %v626
          %v628 = vmul.f32 %v625, %v626
          %v629 = vsub.f32 %v618, %v627
          %v630 = vsub.f32 %v619, %v628
          %v631 = vmul.f32 %v629, %v629
          %v632 = vmul.f32 %v630, %v630
          %633 = vadd.xlane.f32.xlu0 %v631
          %v634 = vpop.xlane.xlu0 %633
          %635 = vadd.xlane.f32.xlu0 %v632
          %v636 = vpop.xlane.xlu0 %635
          %v637 = vmul.f32 %v634, %v626
          %v638 = vmul.f32 %v636, %v626
          %v639 = vadd.f32 %v637, 1e-05
          %v640 = vadd.f32 %v638, 1e-05
          %v641 = vrsqrt.pop %v639
          %v642 = vrsqrt.pop %v640
          %v643 = vmul.f32 %v629, %v641
          %v644 = vmul.f32 %v630, %v642
          %v646 = vlaneseq
          %v647 = vshrl.u32 %v646, 7
          %v648 = vsub.s32 0, %v647
          %v649 = vrot.slane %v620, %v648
          %v651 = vmul.f32 %v643, %v649
          %v652 = vmul.f32 %v644, %v649
          %v654 = vlaneseq
          %v655 = vshrl.u32 %v654, 7
          %v656 = vsub.s32 0, %v655
          %v657 = vrot.slane %v621, %v656
          %v659 = vadd.f32 %v651, %v657
          %v660 = vadd.f32 %v652, %v657
          %v661 = vpack.c.bf16 %v660, %v659
          %v662 = vld [vmem:[#allocation10] sm:$0xff]
          %v663 = vld [vmem:[#allocation10 + $0x8] sm:$0xf]
          %v664 = vld [vmem:[#allocation10 + $0xc] sm:$0xff]
          %v665 = vld [vmem:[#allocation10 + $0x14] sm:$0xf]
          %v666 = vld [vmem:[#allocation10 + $0x18] sm:$0xff]
          %v667 = vld [vmem:[#allocation10 + $0x20] sm:$0xf]
          %v668 = vld [vmem:[#allocation10 + $0x24] sm:$0xff]
          %v669 = vld [vmem:[#allocation10 + $0x2c] sm:$0xf]
          %v670 = vld [vmem:[#allocation10 + $0x30] sm:$0xff]
          %v671 = vld [vmem:[#allocation10 + $0x38] sm:$0xf]
          %v672 = vld [vmem:[#allocation10 + $0x3c] sm:$0xff]
          %v673 = vld [vmem:[#allocation10 + $0x44] sm:$0xf]
          %v674 = vld [vmem:[#allocation10 + $0x48] sm:$0xff]
          %v675 = vld [vmem:[#allocation10 + $0x50] sm:$0xf]
          %v676 = vld [vmem:[#allocation10 + $0x54] sm:$0xff]
          %v677 = vld [vmem:[#allocation10 + $0x5c] sm:$0xf]
          %v678 = vld [vmem:[#allocation10 + $0x60] sm:$0xff]
          %v679 = vld [vmem:[#allocation10 + $0x68] sm:$0xf]
          %v680 = vld [vmem:[#allocation10 + $0x6c] sm:$0xff]
          %v681 = vld [vmem:[#allocation10 + $0x74] sm:$0xf]
          %v682 = vld [vmem:[#allocation10 + $0x78] sm:$0xff]
          %v683 = vld [vmem:[#allocation10 + $0x80] sm:$0xf]
          %v684 = vld [vmem:[#allocation10 + $0x84] sm:$0xff]
          %v685 = vld [vmem:[#allocation10 + $0x8c] sm:$0xf]
          %v686 = vld [vmem:[#allocation10 + $0x90] sm:$0xff]
          %v687 = vld [vmem:[#allocation10 + $0x98] sm:$0xf]
          %v688 = vld [vmem:[#allocation10 + $0x9c] sm:$0xff]
          %v689 = vld [vmem:[#allocation10 + $0xa4] sm:$0xf]
          %v690 = vld [vmem:[#allocation10 + $0xa8] sm:$0xff]
          %v691 = vld [vmem:[#allocation10 + $0xb0] sm:$0xf]
          %v692 = vld [vmem:[#allocation10 + $0xb4] sm:$0xff]
          %v693 = vld [vmem:[#allocation10 + $0xbc] sm:$0xf]
          %v726 = vunpack.c.l.b16 %v662
          %v727 = vunpack.c.h.b16 %v662
          %v728 = vunpack.c.l.b16 %v663
          %v729 = vunpack.c.l.b16 %v664
          %v730 = vunpack.c.h.b16 %v664
          %v731 = vunpack.c.l.b16 %v665
          %v732 = vunpack.c.l.b16 %v666
          %v733 = vunpack.c.h.b16 %v666
          %v734 = vunpack.c.l.b16 %v667
          %v735 = vunpack.c.l.b16 %v668
          %v736 = vunpack.c.h.b16 %v668
          %v737 = vunpack.c.l.b16 %v669
          %v738 = vunpack.c.l.b16 %v670
          %v739 = vunpack.c.h.b16 %v670
          %v740 = vunpack.c.l.b16 %v671
          %v741 = vunpack.c.l.b16 %v672
          %v742 = vunpack.c.h.b16 %v672
          %v743 = vunpack.c.l.b16 %v673
          %v744 = vunpack.c.l.b16 %v674
          %v745 = vunpack.c.h.b16 %v674
          %v746 = vunpack.c.l.b16 %v675
          %v747 = vunpack.c.l.b16 %v676
          %v748 = vunpack.c.h.b16 %v676
          %v749 = vunpack.c.l.b16 %v677
          %v750 = vunpack.c.l.b16 %v678
          %v751 = vunpack.c.h.b16 %v678
          %v752 = vunpack.c.l.b16 %v679
          %v753 = vunpack.c.l.b16 %v680
          %v754 = vunpack.c.h.b16 %v680
          %v755 = vunpack.c.l.b16 %v681
          %v756 = vunpack.c.l.b16 %v682
          %v757 = vunpack.c.h.b16 %v682
          %v758 = vunpack.c.l.b16 %v683
          %v759 = vunpack.c.l.b16 %v684
          %v760 = vunpack.c.h.b16 %v684
          %v761 = vunpack.c.l.b16 %v685
          %v762 = vunpack.c.l.b16 %v686
          %v763 = vunpack.c.h.b16 %v686
          %v764 = vunpack.c.l.b16 %v687
          %v765 = vunpack.c.l.b16 %v688
          %v766 = vunpack.c.h.b16 %v688
          %v767 = vunpack.c.l.b16 %v689
          %v768 = vunpack.c.l.b16 %v690
          %v769 = vunpack.c.h.b16 %v690
          %v770 = vunpack.c.l.b16 %v691
          %v771 = vunpack.c.l.b16 %v692
          %v772 = vunpack.c.h.b16 %v692
          %v773 = vunpack.c.l.b16 %v693
          %v774 = vpack.c.b16 %v729, %v726
          %v775 = vpack.c.b16 %v730, %v727
          %v776 = vpack.c.b16 %v731, %v728
          %v777 = vpack.c.b16 %v735, %v732
          %v778 = vpack.c.b16 %v736, %v733
          %v779 = vpack.c.b16 %v737, %v734
          %v780 = vpack.c.b16 %v741, %v738
          %v781 = vpack.c.b16 %v742, %v739
          %v782 = vpack.c.b16 %v743, %v740
          %v783 = vpack.c.b16 %v747, %v744
          %v784 = vpack.c.b16 %v748, %v745
          %v785 = vpack.c.b16 %v749, %v746
          %v786 = vpack.c.b16 %v753, %v750
          %v787 = vpack.c.b16 %v754, %v751
          %v788 = vpack.c.b16 %v755, %v752
          %v789 = vpack.c.b16 %v759, %v756
          %v790 = vpack.c.b16 %v760, %v757
          %v791 = vpack.c.b16 %v761, %v758
          %v792 = vpack.c.b16 %v765, %v762
          %v793 = vpack.c.b16 %v766, %v763
          %v794 = vpack.c.b16 %v767, %v764
          %v795 = vpack.c.b16 %v771, %v768
          %v796 = vpack.c.b16 %v772, %v769
          %v797 = vpack.c.b16 %v773, %v770
          %822 = vmatprep.subr.bf16.mxu0 %v775
          %823 = vmatpush1.bf16.msra.mxu0 %v774
          %824 = vmatprep.subr.bf16.mxu0 %v778
          %825 = vmatpush1.bf16.msra.mxu0 %v777
          %826 = vmatprep.subr.bf16.mxu0 %v781
          %827 = vmatpush1.bf16.msra.mxu0 %v780
          %828 = vmatprep.subr.bf16.mxu0 %v784
          %829 = vmatpush1.bf16.msra.mxu0 %v783
          %830 = vmatprep.subr.bf16.mxu0 %v787
          %831 = vmatpush1.bf16.msra.mxu0 %v786
          %832 = vmatprep.subr.bf16.mxu0 %v790
          %833 = vmatpush1.bf16.msra.mxu0 %v789
          %834 = vmatprep.subr.bf16.mxu0 %v793
          %835 = vmatpush1.bf16.msra.mxu0 %v792
          %836 = vmatprep.subr.bf16.mxu0 %v796
          %837 = vmatpush1.bf16.msra.mxu0 %v795
          %838 = vmatprep.subr.bf16.mxu0 0
          %839 = vmatpush1.bf16.msra.mxu0 0
          %840 = vmatprep.subr.bf16.mxu0 0
          %841 = vmatpush1.bf16.msra.mxu0 0
          %842 = vmatprep.subr.bf16.mxu0 0
          %843 = vmatpush1.bf16.msra.mxu0 0
          %844 = vmatprep.subr.bf16.mxu0 0
          %845 = vmatpush1.bf16.msra.mxu0 0
          %846 = vmatprep.subr.bf16.mxu0 0
          %847 = vmatpush1.bf16.msra.mxu0 0
          %848 = vmatprep.subr.bf16.mxu0 0
          %849 = vmatpush1.bf16.msra.mxu0 0
          %850 = vmatprep.subr.bf16.mxu0 0
          %851 = vmatpush1.bf16.msra.mxu0 0
          %852 = vmatprep.subr.bf16.mxu0 0
          %853 = vmatpush1.bf16.msra.mxu0 0
          %854 = vmatprep.mubr.bf16.mxu0 0
          %855 = vmatmul.mubr.bf16.gmra.mrb[0].mxu0 %v661
          %v856 = vpop.f32.mrb[0].mxu0
          %v857 = vadd.f32 0.0, %v856
          %v858 = vpop.f32.mrb[0].mxu0
          %v859 = vadd.f32 0.0, %v858
          %v860 = vpop.f32.mrb[0].mxu0
          %v861 = vadd.f32 0.0, %v860
          %v862 = vpop.f32.mrb[0].mxu0
          %v863 = vadd.f32 0.0, %v862
          %864 = vdwg.mxu0
          %865 = vmatprep.subr.bf16.mxu0 0
          %866 = vmatpush1.bf16.msra.mxu0 %v776
          %867 = vmatprep.subr.bf16.mxu0 0
          %868 = vmatpush1.bf16.msra.mxu0 %v779
          %869 = vmatprep.subr.bf16.mxu0 0
          %870 = vmatpush1.bf16.msra.mxu0 %v782
          %871 = vmatprep.subr.bf16.mxu0 0
          %872 = vmatpush1.bf16.msra.mxu0 %v785
          %873 = vmatprep.subr.bf16.mxu0 0
          %874 = vmatpush1.bf16.msra.mxu0 %v788
          %875 = vmatprep.subr.bf16.mxu0 0
          %876 = vmatpush1.bf16.msra.mxu0 %v791
          %877 = vmatprep.subr.bf16.mxu0 0
          %878 = vmatpush1.bf16.msra.mxu0 %v794
          %879 = vmatprep.subr.bf16.mxu0 0
          %880 = vmatpush1.bf16.msra.mxu0 %v797
          %881 = vmatprep.subr.bf16.mxu0 0
          %882 = vmatpush1.bf16.msra.mxu0 0
          %883 = vmatprep.subr.bf16.mxu0 0
          %884 = vmatpush1.bf16.msra.mxu0 0
          %885 = vmatprep.subr.bf16.mxu0 0
          %886 = vmatpush1.bf16.msra.mxu0 0
          %887 = vmatprep.subr.bf16.mxu0 0
          %888 = vmatpush1.bf16.msra.mxu0 0
          %889 = vmatprep.subr.bf16.mxu0 0
          %890 = vmatpush1.bf16.msra.mxu0 0
          %891 = vmatprep.subr.bf16.mxu0 0
          %892 = vmatpush1.bf16.msra.mxu0 0
          %893 = vmatprep.subr.bf16.mxu0 0
          %894 = vmatpush1.bf16.msra.mxu0 0
          %895 = vmatprep.subr.bf16.mxu0 0
          %896 = vmatpush1.bf16.msra.mxu0 0
          %897 = vmatprep.mubr.bf16.mxu0 0
          %898 = vmatmul.mubr.bf16.gmra.mrb[0].mxu0 %v661
          %v899 = vpop.f32.mrb[0].mxu0
          %v900 = vadd.f32 0.0, %v899
          %v901 = vpop.f32.mrb[0].mxu0
          %v902 = vpop.f32.mrb[0].mxu0
          %v903 = vadd.f32 0.0, %v902
          %v904 = vpop.f32.mrb[0].mxu0
          %905 = vdwg.mxu0
          %vm906 = vcmask 261120
          %907 = vst.msk [vmem:[#allocation2] sm:$0xff] %vm906, %v857
          %908 = vst.msk [vmem:[#allocation2 + $0x8] sm:$0xff] %vm906, %v861
          %v909 = vpack.c.bf16 %v863, %v859
          %910 = vst.msk [vmem:[#allocation3] sm:$0xff] %vm906, %v909
          %v911 = vpack.c.bf16 %v903, %v900
          %912 = vst.msk [vmem:[#allocation4] sm:$0xff] %vm906, %v911
          %915 = vrot.lane.b32.xlu0 %v857, 96
          %v916 = vpop.permute.xlu0 %915
          %917 = vrot.lane.b32.xlu0 %v861, 96
          %v918 = vpop.permute.xlu0 %917
          %s921 = scalar_lea.vmem [#allocation2], 16
          %922 = vst.msk [vmem:[%s921] sm:$0xff] %vm906, %v916
          %923 = vst.msk [vmem:[%s921 + $0x8] sm:$0xff] %vm906, %v918
          %925 = vrot.lane.b32.xlu0 %v909, 96
          %v926 = vpop.permute.xlu0 %925
          %s928 = scalar_lea.vmem [#allocation3], 8
          %929 = vst.msk [vmem:[%s928] sm:$0xff] %vm906, %v926
          %931 = vrot.lane.b32.xlu0 %v911, 96
          %v932 = vpop.permute.xlu0 %931
          %s934 = scalar_lea.vmem [#allocation4], 8
          %935 = vst.msk [vmem:[%s934] sm:$0xff] %vm906, %v932
          %936 = vrot.lane.b32.xlu0 %v857, 64
          %v937 = vpop.permute.xlu0 %936
          %938 = vrot.lane.b32.xlu0 %v861, 64
          %v939 = vpop.permute.xlu0 %938
          %s942 = scalar_lea.vmem [#allocation2], 32
          %943 = vst.msk [vmem:[%s942] sm:$0xff] %vm906, %v937
          %944 = vst.msk [vmem:[%s942 + $0x8] sm:$0xff] %vm906, %v939
          %945 = vrot.lane.b32.xlu0 %v909, 64
          %v946 = vpop.permute.xlu0 %945
          %s948 = scalar_lea.vmem [#allocation3], 16
          %949 = vst.msk [vmem:[%s948] sm:$0xff] %vm906, %v946
          %950 = vrot.lane.b32.xlu0 %v911, 64
          %v951 = vpop.permute.xlu0 %950
          %s953 = scalar_lea.vmem [#allocation4], 16
          %954 = vst.msk [vmem:[%s953] sm:$0xff] %vm906, %v951
          %955 = vrot.lane.b32.xlu0 %v857, 32
          %v956 = vpop.permute.xlu0 %955
          %957 = vrot.lane.b32.xlu0 %v861, 32
          %v958 = vpop.permute.xlu0 %957
          %s961 = scalar_lea.vmem [#allocation2], 48
          %962 = vst.msk [vmem:[%s961] sm:$0xff] %vm906, %v956
          %963 = vst.msk [vmem:[%s961 + $0x8] sm:$0xff] %vm906, %v958
          %964 = vrot.lane.b32.xlu0 %v909, 32
          %v965 = vpop.permute.xlu0 %964
          %s967 = scalar_lea.vmem [#allocation3], 24
          %968 = vst.msk [vmem:[%s967] sm:$0xff] %vm906, %v965
          %969 = vrot.lane.b32.xlu0 %v911, 32
          %v970 = vpop.permute.xlu0 %969
          %s972 = scalar_lea.vmem [#allocation4], 24
          %973 = vst.msk [vmem:[%s972] sm:$0xff] %vm906, %v970
        $region100: #{tpu_custom_call.1} parent=71 // pred_fallthru
          _
        %s974 = smul.u32 %s45, 8
        %s975 = scalar_lea.vmem [#allocation2], %s974
        %v976 = vld [vmem:[%s975] sm:$0xff]
        %v977 = vld [vmem:[%s975 + $0x10] sm:$0xff]
        %v978 = vld [vmem:[%s975 + $0x20] sm:$0xff]
        %v979 = vld [vmem:[%s975 + $0x30] sm:$0xff]
        %v980 = vpack.c.bf16 %v976, %v976
        %v981 = vpack.c.bf16 %v977, %v977
        %v982 = vpack.c.bf16 %v978, %v978
        %v983 = vpack.c.bf16 %v979, %v979
        %v984 = vld [vmem:[#allocation3] sm:$0xff]
        %v985 = vld [vmem:[#allocation3 + $0x8] sm:$0xff]
        %v986 = vld [vmem:[#allocation3 + $0x10] sm:$0xff]
        %v987 = vld [vmem:[#allocation3 + $0x18] sm:$0xff]
        %v988 = vld [vmem:[#allocation4] sm:$0xff]
        %v989 = vld [vmem:[#allocation4 + $0x8] sm:$0xff]
        %v990 = vld [vmem:[#allocation4 + $0x10] sm:$0xff]
        %v991 = vld [vmem:[#allocation4 + $0x18] sm:$0xff]
        %vm992 = vcmask 261120
        %v994 = vsel %vm992, %v980, 0
        %v997 = vsel %vm992, %v984, 0
        %999 = vmatprep.subr.bf16.mxu0 0
        %1000 = vmatpush1.bf16.xpose.msra.mxu0 %v997
        %1001 = vmatprep.subr.bf16.mxu0 0
        %1002 = vmatpush1.bf16.xpose.msra.mxu0 0
        %1003 = vmatprep.subr.bf16.mxu0 0
        %1004 = vmatpush1.bf16.xpose.msra.mxu0 0
        %1005 = vmatprep.subr.bf16.mxu0 0
        %1006 = vmatpush1.bf16.xpose.msra.mxu0 0
        %1007 = vmatprep.subr.bf16.mxu0 0
        %1008 = vmatpush1.bf16.xpose.msra.mxu0 0
        %1009 = vmatprep.subr.bf16.mxu0 0
        %1010 = vmatpush1.bf16.xpose.msra.mxu0 0
        %1011 = vmatprep.subr.bf16.mxu0 0
        %1012 = vmatpush1.bf16.xpose.msra.mxu0 0
        %1013 = vmatprep.subr.bf16.mxu0 0
        %1014 = vmatpush1.bf16.xpose.msra.mxu0 0
        %1015 = vmatprep.subr.bf16.mxu0 0
        %1016 = vmatpush1.bf16.xpose.msra.mxu0 0
        %1017 = vmatprep.subr.bf16.mxu0 0
        %1018 = vmatpush1.bf16.xpose.msra.mxu0 0
        %1019 = vmatprep.subr.bf16.mxu0 0
        %1020 = vmatpush1.bf16.xpose.msra.mxu0 0
        %1021 = vmatprep.subr.bf16.mxu0 0
        %1022 = vmatpush1.bf16.xpose.msra.mxu0 0
        %1023 = vmatprep.subr.bf16.mxu0 0
        %1024 = vmatpush1.bf16.xpose.msra.mxu0 0
        %1025 = vmatprep.subr.bf16.mxu0 0
        %1026 = vmatpush1.bf16.xpose.msra.mxu0 0
        %1027 = vmatprep.subr.bf16.mxu0 0
        %1028 = vmatpush1.bf16.xpose.msra.mxu0 0
        %1029 = vmatprep.subr.bf16.mxu0 0
        %1030 = vmatpush1.bf16.xpose.msra.mxu0 0
        %1031 = vmatprep.mubr.bf16.mxu0 0
        %1032 = vmatmul.mubr.bf16.gmra.mrb[0].mxu0 %v994
        %v1033 = vpop.f32.mrb[0].mxu0
        %v1034 = vadd.f32 0.0, %v1033
        %v1035 = vpop.f32.mrb[0].mxu0
        %v1036 = vpop.f32.mrb[0].mxu0
        %v1037 = vpop.f32.mrb[0].mxu0
        %1038 = vdwg.mxu0
        %v1040 = vsel %vm992, %v981, 0
        %v1043 = vsel %vm992, %v985, 0
        %1045 = vmatprep.subr.bf16.mxu0 0
        %1046 = vmatpush1.bf16.xpose.msra.mxu0 %v1043
        %1047 = vmatprep.subr.bf16.mxu0 0
        %1048 = vmatpush1.bf16.xpose.msra.mxu0 0
        %1049 = vmatprep.subr.bf16.mxu0 0
        %1050 = vmatpush1.bf16.xpose.msra.mxu0 0
        %1051 = vmatprep.subr.bf16.mxu0 0
        %1052 = vmatpush1.bf16.xpose.msra.mxu0 0
        %1053 = vmatprep.subr.bf16.mxu0 0
        %1054 = vmatpush1.bf16.xpose.msra.mxu0 0
        %1055 = vmatprep.subr.bf16.mxu0 0
        %1056 = vmatpush1.bf16.xpose.msra.mxu0 0
        %1057 = vmatprep.subr.bf16.mxu0 0
        %1058 = vmatpush1.bf16.xpose.msra.mxu0 0
        %1059 = vmatprep.subr.bf16.mxu0 0
        %1060 = vmatpush1.bf16.xpose.msra.mxu0 0
        %1061 = vmatprep.subr.bf16.mxu0 0
        %1062 = vmatpush1.bf16.xpose.msra.mxu0 0
        %1063 = vmatprep.subr.bf16.mxu0 0
        %1064 = vmatpush1.bf16.xpose.msra.mxu0 0
        %1065 = vmatprep.subr.bf16.mxu0 0
        %1066 = vmatpush1.bf16.xpose.msra.mxu0 0
        %1067 = vmatprep.subr.bf16.mxu0 0
        %1068 = vmatpush1.bf16.xpose.msra.mxu0 0
        %1069 = vmatprep.subr.bf16.mxu0 0
        %1070 = vmatpush1.bf16.xpose.msra.mxu0 0
        %1071 = vmatprep.subr.bf16.mxu0 0
        %1072 = vmatpush1.bf16.xpose.msra.mxu0 0
        %1073 = vmatprep.subr.bf16.mxu0 0
        %1074 = vmatpush1.bf16.xpose.msra.mxu0 0
        %1075 = vmatprep.subr.bf16.mxu0 0
        %1076 = vmatpush1.bf16.xpose.msra.mxu0 0
        %1077 = vmatprep.mubr.bf16.mxu0 0
        %1078 = vmatmul.mubr.bf16.gmra.mrb[0].mxu0 %v1040
        %v1079 = vpop.f32.mrb[0].mxu0
        %v1080 = vadd.f32 0.0, %v1079
        %v1081 = vpop.f32.mrb[0].mxu0
        %v1082 = vpop.f32.mrb[0].mxu0
        %v1083 = vpop.f32.mrb[0].mxu0
        %1084 = vdwg.mxu0
        %v1086 = vsel %vm992, %v982, 0
        %v1089 = vsel %vm992, %v986, 0
        %1091 = vmatprep.subr.bf16.mxu0 0
        %1092 = vmatpush1.bf16.xpose.msra.mxu0 %v1089
        %1093 = vmatprep.subr.bf16.mxu0 0
        %1094 = vmatpush1.bf16.xpose.msra.mxu0 0
        %1095 = vmatprep.subr.bf16.mxu0 0
        %1096 = vmatpush1.bf16.xpose.msra.mxu0 0
        %1097 = vmatprep.subr.bf16.mxu0 0
        %1098 = vmatpush1.bf16.xpose.msra.mxu0 0
        %1099 = vmatprep.subr.bf16.mxu0 0
        %1100 = vmatpush1.bf16.xpose.msra.mxu0 0
        %1101 = vmatprep.subr.bf16.mxu0 0
        %1102 = vmatpush1.bf16.xpose.msra.mxu0 0
        %1103 = vmatprep.subr.bf16.mxu0 0
        %1104 = vmatpush1.bf16.xpose.msra.mxu0 0
        %1105 = vmatprep.subr.bf16.mxu0 0
        %1106 = vmatpush1.bf16.xpose.msra.mxu0 0
        %1107 = vmatprep.subr.bf16.mxu0 0
        %1108 = vmatpush1.bf16.xpose.msra.mxu0 0
        %1109 = vmatprep.subr.bf16.mxu0 0
        %1110 = vmatpush1.bf16.xpose.msra.mxu0 0
        %1111 = vmatprep.subr.bf16.mxu0 0
        %1112 = vmatpush1.bf16.xpose.msra.mxu0 0
        %1113 = vmatprep.subr.bf16.mxu0 0
        %1114 = vmatpush1.bf16.xpose.msra.mxu0 0
        %1115 = vmatprep.subr.bf16.mxu0 0
        %1116 = vmatpush1.bf16.xpose.msra.mxu0 0
        %1117 = vmatprep.subr.bf16.mxu0 0
        %1118 = vmatpush1.bf16.xpose.msra.mxu0 0
        %1119 = vmatprep.subr.bf16.mxu0 0
        %1120 = vmatpush1.bf16.xpose.msra.mxu0 0
        %1121 = vmatprep.subr.bf16.mxu0 0
        %1122 = vmatpush1.bf16.xpose.msra.mxu0 0
        %1123 = vmatprep.mubr.bf16.mxu0 0
        %1124 = vmatmul.mubr.bf16.gmra.mrb[0].mxu0 %v1086
        %v1125 = vpop.f32.mrb[0].mxu0
        %v1126 = vadd.f32 0.0, %v1125
        %v1127 = vpop.f32.mrb[0].mxu0
        %v1128 = vpop.f32.mrb[0].mxu0
        %v1129 = vpop.f32.mrb[0].mxu0
        %1130 = vdwg.mxu0
        %v1132 = vsel %vm992, %v983, 0
        %v1135 = vsel %vm992, %v987, 0
        %1137 = vmatprep.subr.bf16.mxu0 0
        %1138 = vmatpush1.bf16.xpose.msra.mxu0 %v1135
        %1139 = vmatprep.subr.bf16.mxu0 0
        %1140 = vmatpush1.bf16.xpose.msra.mxu0 0
        %1141 = vmatprep.subr.bf16.mxu0 0
        %1142 = vmatpush1.bf16.xpose.msra.mxu0 0
        %1143 = vmatprep.subr.bf16.mxu0 0
        %1144 = vmatpush1.bf16.xpose.msra.mxu0 0
        %1145 = vmatprep.subr.bf16.mxu0 0
        %1146 = vmatpush1.bf16.xpose.msra.mxu0 0
        %1147 = vmatprep.subr.bf16.mxu0 0
        %1148 = vmatpush1.bf16.xpose.msra.mxu0 0
        %1149 = vmatprep.subr.bf16.mxu0 0
        %1150 = vmatpush1.bf16.xpose.msra.mxu0 0
        %1151 = vmatprep.subr.bf16.mxu0 0
        %1152 = vmatpush1.bf16.xpose.msra.mxu0 0
        %1153 = vmatprep.subr.bf16.mxu0 0
        %1154 = vmatpush1.bf16.xpose.msra.mxu0 0
        %1155 = vmatprep.subr.bf16.mxu0 0
        %1156 = vmatpush1.bf16.xpose.msra.mxu0 0
        %1157 = vmatprep.subr.bf16.mxu0 0
        %1158 = vmatpush1.bf16.xpose.msra.mxu0 0
        %1159 = vmatprep.subr.bf16.mxu0 0
        %1160 = vmatpush1.bf16.xpose.msra.mxu0 0
        %1161 = vmatprep.subr.bf16.mxu0 0
        %1162 = vmatpush1.bf16.xpose.msra.mxu0 0
        %1163 = vmatprep.subr.bf16.mxu0 0
        %1164 = vmatpush1.bf16.xpose.msra.mxu0 0
        %1165 = vmatprep.subr.bf16.mxu0 0
        %1166 = vmatpush1.bf16.xpose.msra.mxu0 0
        %1167 = vmatprep.subr.bf16.mxu0 0
        %1168 = vmatpush1.bf16.xpose.msra.mxu0 0
        %1169 = vmatprep.mubr.bf16.mxu0 0
        %1170 = vmatmul.mubr.bf16.gmra.mrb[0].mxu0 %v1132
        %v1171 = vpop.f32.mrb[0].mxu0
        %v1172 = vadd.f32 0.0, %v1171
        %v1173 = vpop.f32.mrb[0].mxu0
        %v1174 = vpop.f32.mrb[0].mxu0
        %v1175 = vpop.f32.mrb[0].mxu0
        %1176 = vdwg.mxu0
        %v1177 = vlaneseq
        %v1178 = vshrl.u32 %v1177, 7
        %v1179 = vstv %s974
        %v1180 = vadd.s32 %v1179, %v1178
        %v1181 = vlaneseq
        %v1182 = vand.u32 %v1181, 127
        %vm1183 = vcmp.le.s32.totalorder %v1182, %v1180
        %v1184 = vsel %vm1183, 1, 0
        %vm1185 = vcmp.eq.s32.totalorder %v1184, 1
        %v1186 = vsel %vm1185, %v1034, -1e+30
        %v1187 = vsel %vm1185, %v1080, -1e+30
        %v1188 = vsel %vm1185, %v1126, -1e+30
        %v1189 = vsel %vm1185, %v1172, -1e+30
        %vm1190 = vcmask 130048
        %v1191 = vsel %vm1190, %v1186, -inf
        %1192 = vmax.xlane.f32.xlu0 %v1191
        %v1193 = vpop.xlane.xlu0 %1192
        %v1194 = vsel %vm1190, %v1187, -inf
        %1195 = vmax.xlane.f32.xlu0 %v1194
        %v1196 = vpop.xlane.xlu0 %1195
        %v1197 = vsel %vm1190, %v1188, -inf
        %1198 = vmax.xlane.f32.xlu0 %v1197
        %v1199 = vpop.xlane.xlu0 %1198
        %v1200 = vsel %vm1190, %v1189, -inf
        %1201 = vmax.xlane.f32.xlu0 %v1200
        %v1202 = vpop.xlane.xlu0 %1201
        %v1203 = vsub.f32 %v1186, %v1193
        %v1204 = vsub.f32 %v1187, %v1196
        %v1205 = vsub.f32 %v1188, %v1199
        %v1206 = vsub.f32 %v1189, %v1202
        %v1207 = vmul.f32 %v1203, 1.442695
        %v1208 = vpow.pop %v1207
        %v1209 = vmul.f32 %v1204, 1.442695
        %v1210 = vpow.pop %v1209
        %v1211 = vmul.f32 %v1205, 1.442695
        %v1212 = vpow.pop %v1211
        %v1213 = vmul.f32 %v1206, 1.442695
        %v1214 = vpow.pop %v1213
        %v1215 = vsel %vm1190, %v1208, 0.0
        %1216 = vadd.xlane.f32.xlu0 %v1215
        %v1217 = vpop.xlane.xlu0 %1216
        %v1218 = vsel %vm1190, %v1210, 0.0
        %1219 = vadd.xlane.f32.xlu0 %v1218
        %v1220 = vpop.xlane.xlu0 %1219
        %v1221 = vsel %vm1190, %v1212, 0.0
        %1222 = vadd.xlane.f32.xlu0 %v1221
        %v1223 = vpop.xlane.xlu0 %1222
        %v1224 = vsel %vm1190, %v1214, 0.0
        %1225 = vadd.xlane.f32.xlu0 %v1224
        %v1226 = vpop.xlane.xlu0 %1225
        %v1227 = vrcp.pop %v1217
        %v1228 = vrcp.pop %v1220
        %v1229 = vrcp.pop %v1223
        %v1230 = vrcp.pop %v1226
        %v1231 = vmul.f32 %v1208, %v1227
        %v1232 = vmul.f32 %v1210, %v1228
        %v1233 = vmul.f32 %v1212, %v1229
        %v1234 = vmul.f32 %v1214, %v1230
        %v1235 = vpack.c.bf16 %v1231, %v1231
        %v1236 = vpack.c.bf16 %v1232, %v1232
        %v1237 = vpack.c.bf16 %v1233, %v1233
        %v1238 = vpack.c.bf16 %v1234, %v1234
        %v1240 = vsel %vm1190, %v1235, 0
        %1242 = vmatprep.subr.bf16.mxu0 0
        %1243 = vmatpush1.bf16.msra.mxu0 %v988
        %1244 = vmatprep.subr.bf16.mxu0 0
        %1245 = vmatpush1.bf16.msra.mxu0 0
        %1246 = vmatprep.subr.bf16.mxu0 0
        %1247 = vmatpush1.bf16.msra.mxu0 0
        %1248 = vmatprep.subr.bf16.mxu0 0
        %1249 = vmatpush1.bf16.msra.mxu0 0
        %1250 = vmatprep.subr.bf16.mxu0 0
        %1251 = vmatpush1.bf16.msra.mxu0 0
        %1252 = vmatprep.subr.bf16.mxu0 0
        %1253 = vmatpush1.bf16.msra.mxu0 0
        %1254 = vmatprep.subr.bf16.mxu0 0
        %1255 = vmatpush1.bf16.msra.mxu0 0
        %1256 = vmatprep.subr.bf16.mxu0 0
        %1257 = vmatpush1.bf16.msra.mxu0 0
        %1258 = vmatprep.subr.bf16.mxu0 0
        %1259 = vmatpush1.bf16.msra.mxu0 0
        %1260 = vmatprep.subr.bf16.mxu0 0
        %1261 = vmatpush1.bf16.msra.mxu0 0
        %1262 = vmatprep.subr.bf16.mxu0 0
        %1263 = vmatpush1.bf16.msra.mxu0 0
        %1264 = vmatprep.subr.bf16.mxu0 0
        %1265 = vmatpush1.bf16.msra.mxu0 0
        %1266 = vmatprep.subr.bf16.mxu0 0
        %1267 = vmatpush1.bf16.msra.mxu0 0
        %1268 = vmatprep.subr.bf16.mxu0 0
        %1269 = vmatpush1.bf16.msra.mxu0 0
        %1270 = vmatprep.subr.bf16.mxu0 0
        %1271 = vmatpush1.bf16.msra.mxu0 0
        %1272 = vmatprep.subr.bf16.mxu0 0
        %1273 = vmatpush1.bf16.msra.mxu0 0
        %1274 = vmatprep.mubr.bf16.mxu0 0
        %1275 = vmatmul.mubr.bf16.gmra.mrb[0].mxu0 %v1240
        %v1276 = vpop.f32.mrb[0].mxu0
        %v1277 = vadd.f32 0.0, %v1276
        %v1278 = vpop.f32.mrb[0].mxu0
        %v1279 = vpop.f32.mrb[0].mxu0
        %v1280 = vpop.f32.mrb[0].mxu0
        %1281 = vdwg.mxu0
        %v1283 = vsel %vm1190, %v1236, 0
        %1285 = vmatprep.subr.bf16.mxu0 0
        %1286 = vmatpush1.bf16.msra.mxu0 %v989
        %1287 = vmatprep.subr.bf16.mxu0 0
        %1288 = vmatpush1.bf16.msra.mxu0 0
        %1289 = vmatprep.subr.bf16.mxu0 0
        %1290 = vmatpush1.bf16.msra.mxu0 0
        %1291 = vmatprep.subr.bf16.mxu0 0
        %1292 = vmatpush1.bf16.msra.mxu0 0
        %1293 = vmatprep.subr.bf16.mxu0 0
        %1294 = vmatpush1.bf16.msra.mxu0 0
        %1295 = vmatprep.subr.bf16.mxu0 0
        %1296 = vmatpush1.bf16.msra.mxu0 0
        %1297 = vmatprep.subr.bf16.mxu0 0
        %1298 = vmatpush1.bf16.msra.mxu0 0
        %1299 = vmatprep.subr.bf16.mxu0 0
        %1300 = vmatpush1.bf16.msra.mxu0 0
        %1301 = vmatprep.subr.bf16.mxu0 0
        %1302 = vmatpush1.bf16.msra.mxu0 0
        %1303 = vmatprep.subr.bf16.mxu0 0
        %1304 = vmatpush1.bf16.msra.mxu0 0
        %1305 = vmatprep.subr.bf16.mxu0 0
        %1306 = vmatpush1.bf16.msra.mxu0 0
        %1307 = vmatprep.subr.bf16.mxu0 0
        %1308 = vmatpush1.bf16.msra.mxu0 0
        %1309 = vmatprep.subr.bf16.mxu0 0
        %1310 = vmatpush1.bf16.msra.mxu0 0
        %1311 = vmatprep.subr.bf16.mxu0 0
        %1312 = vmatpush1.bf16.msra.mxu0 0
        %1313 = vmatprep.subr.bf16.mxu0 0
        %1314 = vmatpush1.bf16.msra.mxu0 0
        %1315 = vmatprep.subr.bf16.mxu0 0
        %1316 = vmatpush1.bf16.msra.mxu0 0
        %1317 = vmatprep.mubr.bf16.mxu0 0
        %1318 = vmatmul.mubr.bf16.gmra.mrb[0].mxu0 %v1283
        %v1319 = vpop.f32.mrb[0].mxu0
        %v1320 = vadd.f32 0.0, %v1319
        %v1321 = vpop.f32.mrb[0].mxu0
        %v1322 = vpop.f32.mrb[0].mxu0
        %v1323 = vpop.f32.mrb[0].mxu0
        %1324 = vdwg.mxu0
        %v1326 = vsel %vm1190, %v1237, 0
        %1328 = vmatprep.subr.bf16.mxu0 0
        %1329 = vmatpush1.bf16.msra.mxu0 %v990
        %1330 = vmatprep.subr.bf16.mxu0 0
        %1331 = vmatpush1.bf16.msra.mxu0 0
        %1332 = vmatprep.subr.bf16.mxu0 0
        %1333 = vmatpush1.bf16.msra.mxu0 0
        %1334 = vmatprep.subr.bf16.mxu0 0
        %1335 = vmatpush1.bf16.msra.mxu0 0
        %1336 = vmatprep.subr.bf16.mxu0 0
        %1337 = vmatpush1.bf16.msra.mxu0 0
        %1338 = vmatprep.subr.bf16.mxu0 0
        %1339 = vmatpush1.bf16.msra.mxu0 0
        %1340 = vmatprep.subr.bf16.mxu0 0
        %1341 = vmatpush1.bf16.msra.mxu0 0
        %1342 = vmatprep.subr.bf16.mxu0 0
        %1343 = vmatpush1.bf16.msra.mxu0 0
        %1344 = vmatprep.subr.bf16.mxu0 0
        %1345 = vmatpush1.bf16.msra.mxu0 0
        %1346 = vmatprep.subr.bf16.mxu0 0
        %1347 = vmatpush1.bf16.msra.mxu0 0
        %1348 = vmatprep.subr.bf16.mxu0 0
        %1349 = vmatpush1.bf16.msra.mxu0 0
        %1350 = vmatprep.subr.bf16.mxu0 0
        %1351 = vmatpush1.bf16.msra.mxu0 0
        %1352 = vmatprep.subr.bf16.mxu0 0
        %1353 = vmatpush1.bf16.msra.mxu0 0
        %1354 = vmatprep.subr.bf16.mxu0 0
        %1355 = vmatpush1.bf16.msra.mxu0 0
        %1356 = vmatprep.subr.bf16.mxu0 0
        %1357 = vmatpush1.bf16.msra.mxu0 0
        %1358 = vmatprep.subr.bf16.mxu0 0
        %1359 = vmatpush1.bf16.msra.mxu0 0
        %1360 = vmatprep.mubr.bf16.mxu0 0
        %1361 = vmatmul.mubr.bf16.gmra.mrb[0].mxu0 %v1326
        %v1362 = vpop.f32.mrb[0].mxu0
        %v1363 = vadd.f32 0.0, %v1362
        %v1364 = vpop.f32.mrb[0].mxu0
        %v1365 = vpop.f32.mrb[0].mxu0
        %v1366 = vpop.f32.mrb[0].mxu0
        %1367 = vdwg.mxu0
        %v1369 = vsel %vm1190, %v1238, 0
        %1371 = vmatprep.subr.bf16.mxu0 0
        %1372 = vmatpush1.bf16.msra.mxu0 %v991
        %1373 = vmatprep.subr.bf16.mxu0 0
        %1374 = vmatpush1.bf16.msra.mxu0 0
        %1375 = vmatprep.subr.bf16.mxu0 0
        %1376 = vmatpush1.bf16.msra.mxu0 0
        %1377 = vmatprep.subr.bf16.mxu0 0
        %1378 = vmatpush1.bf16.msra.mxu0 0
        %1379 = vmatprep.subr.bf16.mxu0 0
        %1380 = vmatpush1.bf16.msra.mxu0 0
        %1381 = vmatprep.subr.bf16.mxu0 0
        %1382 = vmatpush1.bf16.msra.mxu0 0
        %1383 = vmatprep.subr.bf16.mxu0 0
        %1384 = vmatpush1.bf16.msra.mxu0 0
        %1385 = vmatprep.subr.bf16.mxu0 0
        %1386 = vmatpush1.bf16.msra.mxu0 0
        %1387 = vmatprep.subr.bf16.mxu0 0
        %1388 = vmatpush1.bf16.msra.mxu0 0
        %1389 = vmatprep.subr.bf16.mxu0 0
        %1390 = vmatpush1.bf16.msra.mxu0 0
        %1391 = vmatprep.subr.bf16.mxu0 0
        %1392 = vmatpush1.bf16.msra.mxu0 0
        %1393 = vmatprep.subr.bf16.mxu0 0
        %1394 = vmatpush1.bf16.msra.mxu0 0
        %1395 = vmatprep.subr.bf16.mxu0 0
        %1396 = vmatpush1.bf16.msra.mxu0 0
        %1397 = vmatprep.subr.bf16.mxu0 0
        %1398 = vmatpush1.bf16.msra.mxu0 0
        %1399 = vmatprep.subr.bf16.mxu0 0
        %1400 = vmatpush1.bf16.msra.mxu0 0
        %1401 = vmatprep.subr.bf16.mxu0 0
        %1402 = vmatpush1.bf16.msra.mxu0 0
        %1403 = vmatprep.mubr.bf16.mxu0 0
        %1404 = vmatmul.mubr.bf16.gmra.mrb[0].mxu0 %v1369
        %v1405 = vpop.f32.mrb[0].mxu0
        %v1406 = vadd.f32 0.0, %v1405
        %v1407 = vpop.f32.mrb[0].mxu0
        %v1408 = vpop.f32.mrb[0].mxu0
        %v1409 = vpop.f32.mrb[0].mxu0
        %1410 = vdwg.mxu0
        %v1411 = vpack.c.bf16 %v1277, %v1277
        %v1412 = vld [vmem:[#allocation11] sm:$0xf]
        %v1413 = vld [vmem:[#allocation11 + $0x4] sm:$0xf]
        %v1414 = vld [vmem:[#allocation11 + $0x8] sm:$0xf]
        %v1415 = vld [vmem:[#allocation11 + $0xc] sm:$0xf]
        %v1416 = vpack.c.bf16 %v1320, %v1320
        %v1417 = vld [vmem:[#allocation11 + $0x10] sm:$0xf]
        %v1418 = vld [vmem:[#allocation11 + $0x14] sm:$0xf]
        %v1419 = vld [vmem:[#allocation11 + $0x18] sm:$0xf]
        %v1420 = vld [vmem:[#allocation11 + $0x1c] sm:$0xf]
        %v1425 = vunpack.c.l.b16 %v1417
        %v1426 = vunpack.c.l.b16 %v1418
        %v1427 = vunpack.c.l.b16 %v1419
        %v1428 = vunpack.c.l.b16 %v1420
        %v1429 = vpack.c.b16 %v1426, %v1425
        %v1430 = vpack.c.b16 %v1428, %v1427
        %v1434 = vsel %vm992, %v1416, 0
        %1436 = vmatprep.subr.bf16.mxu0 0
        %1437 = vmatpush1.bf16.msra.mxu0 %v1429
        %1438 = vmatprep.subr.bf16.mxu0 0
        %1439 = vmatpush1.bf16.msra.mxu0 %v1430
        %1440 = vmatprep.subr.bf16.mxu0 0
        %1441 = vmatpush1.bf16.msra.mxu0 0
        %1442 = vmatprep.subr.bf16.mxu0 0
        %1443 = vmatpush1.bf16.msra.mxu0 0
        %1444 = vmatprep.subr.bf16.mxu0 0
        %1445 = vmatpush1.bf16.msra.mxu0 0
        %1446 = vmatprep.subr.bf16.mxu0 0
        %1447 = vmatpush1.bf16.msra.mxu0 0
        %1448 = vmatprep.subr.bf16.mxu0 0
        %1449 = vmatpush1.bf16.msra.mxu0 0
        %1450 = vmatprep.subr.bf16.mxu0 0
        %1451 = vmatpush1.bf16.msra.mxu0 0
        %1452 = vmatprep.subr.bf16.mxu0 0
        %1453 = vmatpush1.bf16.msra.mxu0 0
        %1454 = vmatprep.subr.bf16.mxu0 0
        %1455 = vmatpush1.bf16.msra.mxu0 0
        %1456 = vmatprep.subr.bf16.mxu0 0
        %1457 = vmatpush1.bf16.msra.mxu0 0
        %1458 = vmatprep.subr.bf16.mxu0 0
        %1459 = vmatpush1.bf16.msra.mxu0 0
        %1460 = vmatprep.subr.bf16.mxu0 0
        %1461 = vmatpush1.bf16.msra.mxu0 0
        %1462 = vmatprep.subr.bf16.mxu0 0
        %1463 = vmatpush1.bf16.msra.mxu0 0
        %1464 = vmatprep.subr.bf16.mxu0 0
        %1465 = vmatpush1.bf16.msra.mxu0 0
        %1466 = vmatprep.subr.bf16.mxu0 0
        %1467 = vmatpush1.bf16.msra.mxu0 0
        %1468 = vmatprep.mubr.bf16.mxu0 0
        %1469 = vmatmul.mubr.bf16.gmra.mrb[0].mxu0 %v1434
        %v1470 = vpop.f32.mrb[0].mxu0
        %v1471 = vadd.f32 0.0, %v1470
        %v1472 = vpop.f32.mrb[0].mxu0
        %v1473 = vpop.f32.mrb[0].mxu0
        %v1474 = vpop.f32.mrb[0].mxu0
        %1475 = vdwg.mxu0
        %v1480 = vunpack.c.l.b16 %v1412
        %v1481 = vunpack.c.l.b16 %v1413
        %v1482 = vunpack.c.l.b16 %v1414
        %v1483 = vunpack.c.l.b16 %v1415
        %v1484 = vpack.c.b16 %v1481, %v1480
        %v1485 = vpack.c.b16 %v1483, %v1482
        %v1489 = vsel %vm992, %v1411, 0
        %1491 = vmatprep.subr.bf16.mxu0 0
        %1492 = vmatpush1.bf16.msra.mxu0 %v1484
        %1493 = vmatprep.subr.bf16.mxu0 0
        %1494 = vmatpush1.bf16.msra.mxu0 %v1485
        %1495 = vmatprep.subr.bf16.mxu0 0
        %1496 = vmatpush1.bf16.msra.mxu0 0
        %1497 = vmatprep.subr.bf16.mxu0 0
        %1498 = vmatpush1.bf16.msra.mxu0 0
        %1499 = vmatprep.subr.bf16.mxu0 0
        %1500 = vmatpush1.bf16.msra.mxu0 0
        %1501 = vmatprep.subr.bf16.mxu0 0
        %1502 = vmatpush1.bf16.msra.mxu0 0
        %1503 = vmatprep.subr.bf16.mxu0 0
        %1504 = vmatpush1.bf16.msra.mxu0 0
        %1505 = vmatprep.subr.bf16.mxu0 0
        %1506 = vmatpush1.bf16.msra.mxu0 0
        %1507 = vmatprep.subr.bf16.mxu0 0
        %1508 = vmatpush1.bf16.msra.mxu0 0
        %1509 = vmatprep.subr.bf16.mxu0 0
        %1510 = vmatpush1.bf16.msra.mxu0 0
        %1511 = vmatprep.subr.bf16.mxu0 0
        %1512 = vmatpush1.bf16.msra.mxu0 0
        %1513 = vmatprep.subr.bf16.mxu0 0
        %1514 = vmatpush1.bf16.msra.mxu0 0
        %1515 = vmatprep.subr.bf16.mxu0 0
        %1516 = vmatpush1.bf16.msra.mxu0 0
        %1517 = vmatprep.subr.bf16.mxu0 0
        %1518 = vmatpush1.bf16.msra.mxu0 0
        %1519 = vmatprep.subr.bf16.mxu0 0
        %1520 = vmatpush1.bf16.msra.mxu0 0
        %1521 = vmatprep.subr.bf16.mxu0 0
        %1522 = vmatpush1.bf16.msra.mxu0 0
        %1523 = vmatprep.mubr.bf16.mxu0 0
        %1524 = vmatmul.mubr.bf16.gmra.mrb[0].mxu0 %v1489
        %v1525 = vpop.f32.mrb[0].mxu0
        %v1526 = vadd.f32 %v1471, %v1525
        %v1527 = vpop.f32.mrb[0].mxu0
        %v1528 = vpop.f32.mrb[0].mxu0
        %v1529 = vpop.f32.mrb[0].mxu0
        %1530 = vdwg.mxu0
        %v1531 = vpack.c.bf16 %v1363, %v1363
        %v1532 = vld [vmem:[#allocation11 + $0x20] sm:$0xf]
        %v1533 = vld [vmem:[#allocation11 + $0x24] sm:$0xf]
        %v1534 = vld [vmem:[#allocation11 + $0x28] sm:$0xf]
        %v1535 = vld [vmem:[#allocation11 + $0x2c] sm:$0xf]
        %v1540 = vunpack.c.l.b16 %v1532
        %v1541 = vunpack.c.l.b16 %v1533
        %v1542 = vunpack.c.l.b16 %v1534
        %v1543 = vunpack.c.l.b16 %v1535
        %v1544 = vpack.c.b16 %v1541, %v1540
        %v1545 = vpack.c.b16 %v1543, %v1542
        %v1549 = vsel %vm992, %v1531, 0
        %1551 = vmatprep.subr.bf16.mxu0 0
        %1552 = vmatpush1.bf16.msra.mxu0 %v1544
        %1553 = vmatprep.subr.bf16.mxu0 0
        %1554 = vmatpush1.bf16.msra.mxu0 %v1545
        %1555 = vmatprep.subr.bf16.mxu0 0
        %1556 = vmatpush1.bf16.msra.mxu0 0
        %1557 = vmatprep.subr.bf16.mxu0 0
        %1558 = vmatpush1.bf16.msra.mxu0 0
        %1559 = vmatprep.subr.bf16.mxu0 0
        %1560 = vmatpush1.bf16.msra.mxu0 0
        %1561 = vmatprep.subr.bf16.mxu0 0
        %1562 = vmatpush1.bf16.msra.mxu0 0
        %1563 = vmatprep.subr.bf16.mxu0 0
        %1564 = vmatpush1.bf16.msra.mxu0 0
        %1565 = vmatprep.subr.bf16.mxu0 0
        %1566 = vmatpush1.bf16.msra.mxu0 0
        %1567 = vmatprep.subr.bf16.mxu0 0
        %1568 = vmatpush1.bf16.msra.mxu0 0
        %1569 = vmatprep.subr.bf16.mxu0 0
        %1570 = vmatpush1.bf16.msra.mxu0 0
        %1571 = vmatprep.subr.bf16.mxu0 0
        %1572 = vmatpush1.bf16.msra.mxu0 0
        %1573 = vmatprep.subr.bf16.mxu0 0
        %1574 = vmatpush1.bf16.msra.mxu0 0
        %1575 = vmatprep.subr.bf16.mxu0 0
        %1576 = vmatpush1.bf16.msra.mxu0 0
        %1577 = vmatprep.subr.bf16.mxu0 0
        %1578 = vmatpush1.bf16.msra.mxu0 0
        %1579 = vmatprep.subr.bf16.mxu0 0
        %1580 = vmatpush1.bf16.msra.mxu0 0
        %1581 = vmatprep.subr.bf16.mxu0 0
        %1582 = vmatpush1.bf16.msra.mxu0 0
        %1583 = vmatprep.mubr.bf16.mxu0 0
        %1584 = vmatmul.mubr.bf16.gmra.mrb[0].mxu0 %v1549
        %v1585 = vpop.f32.mrb[0].mxu0
        %v1586 = vadd.f32 0.0, %v1585
        %v1587 = vpop.f32.mrb[0].mxu0
        %v1588 = vpop.f32.mrb[0].mxu0
        %v1589 = vpop.f32.mrb[0].mxu0
        %1590 = vdwg.mxu0
        %v1591 = vadd.f32 %v1526, %v1586
        %v1592 = vpack.c.bf16 %v1406, %v1406
        %v1593 = vld [vmem:[#allocation11 + $0x30] sm:$0xf]
        %v1594 = vld [vmem:[#allocation11 + $0x34] sm:$0xf]
        %v1595 = vld [vmem:[#allocation11 + $0x38] sm:$0xf]
        %v1596 = vld [vmem:[#allocation11 + $0x3c] sm:$0xf]
        %v1601 = vunpack.c.l.b16 %v1593
        %v1602 = vunpack.c.l.b16 %v1594
        %v1603 = vunpack.c.l.b16 %v1595
        %v1604 = vunpack.c.l.b16 %v1596
        %v1605 = vpack.c.b16 %v1602, %v1601
        %v1606 = vpack.c.b16 %v1604, %v1603
        %v1610 = vsel %vm992, %v1592, 0
        %1612 = vmatprep.subr.bf16.mxu0 0
        %1613 = vmatpush1.bf16.msra.mxu0 %v1605
        %1614 = vmatprep.subr.bf16.mxu0 0
        %1615 = vmatpush1.bf16.msra.mxu0 %v1606
        %1616 = vmatprep.subr.bf16.mxu0 0
        %1617 = vmatpush1.bf16.msra.mxu0 0
        %1618 = vmatprep.subr.bf16.mxu0 0
        %1619 = vmatpush1.bf16.msra.mxu0 0
        %1620 = vmatprep.subr.bf16.mxu0 0
        %1621 = vmatpush1.bf16.msra.mxu0 0
        %1622 = vmatprep.subr.bf16.mxu0 0
        %1623 = vmatpush1.bf16.msra.mxu0 0
        %1624 = vmatprep.subr.bf16.mxu0 0
        %1625 = vmatpush1.bf16.msra.mxu0 0
        %1626 = vmatprep.subr.bf16.mxu0 0
        %1627 = vmatpush1.bf16.msra.mxu0 0
        %1628 = vmatprep.subr.bf16.mxu0 0
        %1629 = vmatpush1.bf16.msra.mxu0 0
        %1630 = vmatprep.subr.bf16.mxu0 0
        %1631 = vmatpush1.bf16.msra.mxu0 0
        %1632 = vmatprep.subr.bf16.mxu0 0
        %1633 = vmatpush1.bf16.msra.mxu0 0
        %1634 = vmatprep.subr.bf16.mxu0 0
        %1635 = vmatpush1.bf16.msra.mxu0 0
        %1636 = vmatprep.subr.bf16.mxu0 0
        %1637 = vmatpush1.bf16.msra.mxu0 0
        %1638 = vmatprep.subr.bf16.mxu0 0
        %1639 = vmatpush1.bf16.msra.mxu0 0
        %1640 = vmatprep.subr.bf16.mxu0 0
        %1641 = vmatpush1.bf16.msra.mxu0 0
        %1642 = vmatprep.subr.bf16.mxu0 0
        %1643 = vmatpush1.bf16.msra.mxu0 0
        %1644 = vmatprep.mubr.bf16.mxu0 0
        %1645 = vmatmul.mubr.bf16.gmra.mrb[0].mxu0 %v1610
        %v1646 = vpop.f32.mrb[0].mxu0
        %v1647 = vadd.f32 0.0, %v1646
        %v1648 = vpop.f32.mrb[0].mxu0
        %v1649 = vpop.f32.mrb[0].mxu0
        %v1650 = vpop.f32.mrb[0].mxu0
        %1651 = vdwg.mxu0
        %v1652 = vadd.f32 %v1591, %v1647
        %v1653 = vld [vmem:[%s6] sm:$0x1]
        %v1655 = vlaneseq
        %v1656 = vshrl.u32 %v1655, 7
        %v1657 = vsub.s32 0, %v1656
        %v1658 = vrot.slane %v1653, %v1657
        %v1660 = vadd.f32 %v1652, %v1658
        %s1661 = scalar_lea.vmem %s533, %s974 [#allocation5]
        %v1662 = vld [vmem:[%s1661] sm:$0xff]
        %v1663 = vadd.f32 %v1662, %v1660
        %v1664 = vld [vmem:[%s7] sm:$0x1]
        %v1665 = vld [vmem:[%s8] sm:$0x1]
        %1666 = vadd.xlane.f32.xlu0 %v1663
        %v1667 = vpop.xlane.xlu0 %1666
        %v1668 = vrcp.pop 128.0
        %v1669 = vmul.f32 %v1667, %v1668
        %v1670 = vsub.f32 %v1663, %v1669
        %v1671 = vmul.f32 %v1670, %v1670
        %1672 = vadd.xlane.f32.xlu0 %v1671
        %v1673 = vpop.xlane.xlu0 %1672
        %v1674 = vmul.f32 %v1673, %v1668
        %v1675 = vadd.f32 %v1674, 1e-05
        %v1676 = vrsqrt.pop %v1675
        %v1677 = vmul.f32 %v1670, %v1676
        %v1679 = vlaneseq
        %v1680 = vshrl.u32 %v1679, 7
        %v1681 = vsub.s32 0, %v1680
        %v1682 = vrot.slane %v1664, %v1681
        %v1684 = vmul.f32 %v1677, %v1682
        %v1686 = vlaneseq
        %v1687 = vshrl.u32 %v1686, 7
        %v1688 = vsub.s32 0, %v1687
        %v1689 = vrot.slane %v1665, %v1688
        %v1691 = vadd.f32 %v1684, %v1689
        %v1692 = vpack.c.bf16 %v1691, %v1691
        %v1693 = vld [vmem:[#allocation13] sm:$0xff]
        %v1694 = vld [vmem:[#allocation13 + $0x8] sm:$0xff]
        %v1695 = vld [vmem:[#allocation13 + $0x10] sm:$0xff]
        %v1696 = vld [vmem:[#allocation13 + $0x18] sm:$0xff]
        %v1697 = vld [vmem:[#allocation13 + $0x20] sm:$0xff]
        %v1698 = vld [vmem:[#allocation13 + $0x28] sm:$0xff]
        %v1699 = vld [vmem:[#allocation13 + $0x30] sm:$0xff]
        %v1700 = vld [vmem:[#allocation13 + $0x38] sm:$0xff]
        %v1701 = vld [vmem:[#allocation13 + $0x40] sm:$0xff]
        %v1702 = vld [vmem:[#allocation13 + $0x48] sm:$0xff]
        %v1703 = vld [vmem:[#allocation13 + $0x50] sm:$0xff]
        %v1704 = vld [vmem:[#allocation13 + $0x58] sm:$0xff]
        %v1705 = vld [vmem:[#allocation13 + $0x60] sm:$0xff]
        %v1706 = vld [vmem:[#allocation13 + $0x68] sm:$0xff]
        %v1707 = vld [vmem:[#allocation13 + $0x70] sm:$0xff]
        %v1708 = vld [vmem:[#allocation13 + $0x78] sm:$0xff]
        %v1709 = vld [vmem:[#allocation13 + $0x80] sm:$0xff]
        %v1710 = vld [vmem:[#allocation13 + $0x88] sm:$0xff]
        %v1711 = vld [vmem:[#allocation13 + $0x90] sm:$0xff]
        %v1712 = vld [vmem:[#allocation13 + $0x98] sm:$0xff]
        %v1713 = vld [vmem:[#allocation13 + $0xa0] sm:$0xff]
        %v1714 = vld [vmem:[#allocation13 + $0xa8] sm:$0xff]
        %v1715 = vld [vmem:[#allocation13 + $0xb0] sm:$0xff]
        %v1716 = vld [vmem:[#allocation13 + $0xb8] sm:$0xff]
        %v1717 = vld [vmem:[#allocation13 + $0xc0] sm:$0xff]
        %v1718 = vld [vmem:[#allocation13 + $0xc8] sm:$0xff]
        %v1719 = vld [vmem:[#allocation13 + $0xd0] sm:$0xff]
        %v1720 = vld [vmem:[#allocation13 + $0xd8] sm:$0xff]
        %v1721 = vld [vmem:[#allocation13 + $0xe0] sm:$0xff]
        %v1722 = vld [vmem:[#allocation13 + $0xe8] sm:$0xff]
        %v1723 = vld [vmem:[#allocation13 + $0xf0] sm:$0xff]
        %v1724 = vld [vmem:[#allocation13 + $0xf8] sm:$0xff]
        %v1725 = vld [vmem:[%s10] sm:$0xf]
        %v1727 = vlaneseq
        %v1728 = vshrl.u32 %v1727, 7
        %v1729 = vsub.s32 0, %v1728
        %v1730 = vrot.slane %v1725, %v1729
        %v1731 = vlaneseq
        %v1732 = vshrl.u32 %v1731, 7
        %v1733 = vsub.s32 1, %v1732
        %v1734 = vrot.slane %v1725, %v1733
        %v1735 = vlaneseq
        %v1736 = vshrl.u32 %v1735, 7
        %v1737 = vsub.s32 2, %v1736
        %v1738 = vrot.slane %v1725, %v1737
        %v1739 = vlaneseq
        %v1740 = vshrl.u32 %v1739, 7
        %v1741 = vsub.s32 3, %v1740
        %v1742 = vrot.slane %v1725, %v1741
        %v1779 = vunpack.c.l.b16 %v1693
        %v1780 = vunpack.c.h.b16 %v1693
        %v1781 = vunpack.c.l.b16 %v1694
        %v1782 = vunpack.c.h.b16 %v1694
        %v1783 = vunpack.c.l.b16 %v1695
        %v1784 = vunpack.c.h.b16 %v1695
        %v1785 = vunpack.c.l.b16 %v1696
        %v1786 = vunpack.c.h.b16 %v1696
        %v1787 = vunpack.c.l.b16 %v1697
        %v1788 = vunpack.c.h.b16 %v1697
        %v1789 = vunpack.c.l.b16 %v1698
        %v1790 = vunpack.c.h.b16 %v1698
        %v1791 = vunpack.c.l.b16 %v1699
        %v1792 = vunpack.c.h.b16 %v1699
        %v1793 = vunpack.c.l.b16 %v1700
        %v1794 = vunpack.c.h.b16 %v1700
        %v1795 = vunpack.c.l.b16 %v1701
        %v1796 = vunpack.c.h.b16 %v1701
        %v1797 = vunpack.c.l.b16 %v1702
        %v1798 = vunpack.c.h.b16 %v1702
        %v1799 = vunpack.c.l.b16 %v1703
        %v1800 = vunpack.c.h.b16 %v1703
        %v1801 = vunpack.c.l.b16 %v1704
        %v1802 = vunpack.c.h.b16 %v1704
        %v1803 = vunpack.c.l.b16 %v1705
        %v1804 = vunpack.c.h.b16 %v1705
        %v1805 = vunpack.c.l.b16 %v1706
        %v1806 = vunpack.c.h.b16 %v1706
        %v1807 = vunpack.c.l.b16 %v1707
        %v1808 = vunpack.c.h.b16 %v1707
        %v1809 = vunpack.c.l.b16 %v1708
        %v1810 = vunpack.c.h.b16 %v1708
        %v1811 = vunpack.c.l.b16 %v1709
        %v1812 = vunpack.c.h.b16 %v1709
        %v1813 = vunpack.c.l.b16 %v1710
        %v1814 = vunpack.c.h.b16 %v1710
        %v1815 = vunpack.c.l.b16 %v1711
        %v1816 = vunpack.c.h.b16 %v1711
        %v1817 = vunpack.c.l.b16 %v1712
        %v1818 = vunpack.c.h.b16 %v1712
        %v1819 = vunpack.c.l.b16 %v1713
        %v1820 = vunpack.c.h.b16 %v1713
        %v1821 = vunpack.c.l.b16 %v1714
        %v1822 = vunpack.c.h.b16 %v1714
        %v1823 = vunpack.c.l.b16 %v1715
        %v1824 = vunpack.c.h.b16 %v1715
        %v1825 = vunpack.c.l.b16 %v1716
        %v1826 = vunpack.c.h.b16 %v1716
        %v1827 = vunpack.c.l.b16 %v1717
        %v1828 = vunpack.c.h.b16 %v1717
        %v1829 = vunpack.c.l.b16 %v1718
        %v1830 = vunpack.c.h.b16 %v1718
        %v1831 = vunpack.c.l.b16 %v1719
        %v1832 = vunpack.c.h.b16 %v1719
        %v1833 = vunpack.c.l.b16 %v1720
        %v1834 = vunpack.c.h.b16 %v1720
        %v1835 = vunpack.c.l.b16 %v1721
        %v1836 = vunpack.c.h.b16 %v1721
        %v1837 = vunpack.c.l.b16 %v1722
        %v1838 = vunpack.c.h.b16 %v1722
        %v1839 = vunpack.c.l.b16 %v1723
        %v1840 = vunpack.c.h.b16 %v1723
        %v1841 = vunpack.c.l.b16 %v1724
        %v1842 = vunpack.c.h.b16 %v1724
        %v1843 = vpack.c.b16 %v1783, %v1779
        %v1844 = vpack.c.b16 %v1784, %v1780
        %v1845 = vpack.c.b16 %v1785, %v1781
        %v1846 = vpack.c.b16 %v1786, %v1782
        %v1847 = vpack.c.b16 %v1791, %v1787
        %v1848 = vpack.c.b16 %v1792, %v1788
        %v1849 = vpack.c.b16 %v1793, %v1789
        %v1850 = vpack.c.b16 %v1794, %v1790
        %v1851 = vpack.c.b16 %v1799, %v1795
        %v1852 = vpack.c.b16 %v1800, %v1796
        %v1853 = vpack.c.b16 %v1801, %v1797
        %v1854 = vpack.c.b16 %v1802, %v1798
        %v1855 = vpack.c.b16 %v1807, %v1803
        %v1856 = vpack.c.b16 %v1808, %v1804
        %v1857 = vpack.c.b16 %v1809, %v1805
        %v1858 = vpack.c.b16 %v1810, %v1806
        %v1859 = vpack.c.b16 %v1815, %v1811
        %v1860 = vpack.c.b16 %v1816, %v1812
        %v1861 = vpack.c.b16 %v1817, %v1813
        %v1862 = vpack.c.b16 %v1818, %v1814
        %v1863 = vpack.c.b16 %v1823, %v1819
        %v1864 = vpack.c.b16 %v1824, %v1820
        %v1865 = vpack.c.b16 %v1825, %v1821
        %v1866 = vpack.c.b16 %v1826, %v1822
        %v1867 = vpack.c.b16 %v1831, %v1827
        %v1868 = vpack.c.b16 %v1832, %v1828
        %v1869 = vpack.c.b16 %v1833, %v1829
        %v1870 = vpack.c.b16 %v1834, %v1830
        %v1871 = vpack.c.b16 %v1839, %v1835
        %v1872 = vpack.c.b16 %v1840, %v1836
        %v1873 = vpack.c.b16 %v1841, %v1837
        %v1874 = vpack.c.b16 %v1842, %v1838
        %1907 = vmatprep.subr.bf16.mxu0 %v1844
        %1908 = vmatpush1.bf16.msra.mxu0 %v1843
        %1909 = vmatprep.subr.bf16.mxu0 %v1848
        %1910 = vmatpush1.bf16.msra.mxu0 %v1847
        %1911 = vmatprep.subr.bf16.mxu0 %v1852
        %1912 = vmatpush1.bf16.msra.mxu0 %v1851
        %1913 = vmatprep.subr.bf16.mxu0 %v1856
        %1914 = vmatpush1.bf16.msra.mxu0 %v1855
        %1915 = vmatprep.subr.bf16.mxu0 %v1860
        %1916 = vmatpush1.bf16.msra.mxu0 %v1859
        %1917 = vmatprep.subr.bf16.mxu0 %v1864
        %1918 = vmatpush1.bf16.msra.mxu0 %v1863
        %1919 = vmatprep.subr.bf16.mxu0 %v1868
        %1920 = vmatpush1.bf16.msra.mxu0 %v1867
        %1921 = vmatprep.subr.bf16.mxu0 %v1872
        %1922 = vmatpush1.bf16.msra.mxu0 %v1871
        %1923 = vmatprep.subr.bf16.mxu0 0
        %1924 = vmatpush1.bf16.msra.mxu0 0
        %1925 = vmatprep.subr.bf16.mxu0 0
        %1926 = vmatpush1.bf16.msra.mxu0 0
        %1927 = vmatprep.subr.bf16.mxu0 0
        %1928 = vmatpush1.bf16.msra.mxu0 0
        %1929 = vmatprep.subr.bf16.mxu0 0
        %1930 = vmatpush1.bf16.msra.mxu0 0
        %1931 = vmatprep.subr.bf16.mxu0 0
        %1932 = vmatpush1.bf16.msra.mxu0 0
        %1933 = vmatprep.subr.bf16.mxu0 0
        %1934 = vmatpush1.bf16.msra.mxu0 0
        %1935 = vmatprep.subr.bf16.mxu0 0
        %1936 = vmatpush1.bf16.msra.mxu0 0
        %1937 = vmatprep.subr.bf16.mxu0 0
        %1938 = vmatpush1.bf16.msra.mxu0 0
        %1939 = vmatprep.mubr.bf16.mxu0 0
        %1940 = vmatmul.mubr.bf16.gmra.mrb[0].mxu0 %v1692
        %v1941 = vpop.f32.mrb[0].mxu0
        %v1942 = vadd.f32 %v1730, %v1941
        %v1943 = vpop.f32.mrb[0].mxu0
        %v1944 = vadd.f32 %v1734, %v1943
        %v1945 = vpop.f32.mrb[0].mxu0
        %v1946 = vpop.f32.mrb[0].mxu0
        %1947 = vdwg.mxu0
        %1948 = vmatprep.subr.bf16.mxu0 %v1846
        %1949 = vmatpush1.bf16.msra.mxu0 %v1845
        %1950 = vmatprep.subr.bf16.mxu0 %v1850
        %1951 = vmatpush1.bf16.msra.mxu0 %v1849
        %1952 = vmatprep.subr.bf16.mxu0 %v1854
        %1953 = vmatpush1.bf16.msra.mxu0 %v1853
        %1954 = vmatprep.subr.bf16.mxu0 %v1858
        %1955 = vmatpush1.bf16.msra.mxu0 %v1857
        %1956 = vmatprep.subr.bf16.mxu0 %v1862
        %1957 = vmatpush1.bf16.msra.mxu0 %v1861
        %1958 = vmatprep.subr.bf16.mxu0 %v1866
        %1959 = vmatpush1.bf16.msra.mxu0 %v1865
        %1960 = vmatprep.subr.bf16.mxu0 %v1870
        %1961 = vmatpush1.bf16.msra.mxu0 %v1869
        %1962 = vmatprep.subr.bf16.mxu0 %v1874
        %1963 = vmatpush1.bf16.msra.mxu0 %v1873
        %1964 = vmatprep.subr.bf16.mxu0 0
        %1965 = vmatpush1.bf16.msra.mxu0 0
        %1966 = vmatprep.subr.bf16.mxu0 0
        %1967 = vmatpush1.bf16.msra.mxu0 0
        %1968 = vmatprep.subr.bf16.mxu0 0
        %1969 = vmatpush1.bf16.msra.mxu0 0
        %1970 = vmatprep.subr.bf16.mxu0 0
        %1971 = vmatpush1.bf16.msra.mxu0 0
        %1972 = vmatprep.subr.bf16.mxu0 0
        %1973 = vmatpush1.bf16.msra.mxu0 0
        %1974 = vmatprep.subr.bf16.mxu0 0
        %1975 = vmatpush1.bf16.msra.mxu0 0
        %1976 = vmatprep.subr.bf16.mxu0 0
        %1977 = vmatpush1.bf16.msra.mxu0 0
        %1978 = vmatprep.subr.bf16.mxu0 0
        %1979 = vmatpush1.bf16.msra.mxu0 0
        %1980 = vmatprep.mubr.bf16.mxu0 0
        %1981 = vmatmul.mubr.bf16.gmra.mrb[0].mxu0 %v1692
        %v1982 = vpop.f32.mrb[0].mxu0
        %v1983 = vadd.f32 %v1738, %v1982
        %v1984 = vpop.f32.mrb[0].mxu0
        %v1985 = vadd.f32 %v1742, %v1984
        %v1986 = vpop.f32.mrb[0].mxu0
        %v1987 = vpop.f32.mrb[0].mxu0
        %1988 = vdwg.mxu0
        %v1989 = vld [vmem:[%s542] sm:$0xff]
        %v1990 = vld [vmem:[%s542 + $0x8] sm:$0xff]
        %v1991 = vld [vmem:[%s542 + $0x10] sm:$0xff]
        %v1992 = vld [vmem:[%s542 + $0x18] sm:$0xff]
        %v1993 = vadd.f32 %v1942, %v1989
        %v1994 = vadd.f32 %v1944, %v1990
        %v1995 = vadd.f32 %v1983, %v1991
        %v1996 = vadd.f32 %v1985, %v1992
        %v1997 = vtanh.pop %v1993
        %v1998 = vtanh.pop %v1994
        %v1999 = vtanh.pop %v1995
        %v2000 = vtanh.pop %v1996
        %2001 = vst [vmem:[%s612] sm:$0xff] %v1997
        %2002 = vst [vmem:[%s612 + $0x8] sm:$0xff] %v1998
        %2003 = vst [vmem:[%s612 + $0x10] sm:$0xff] %v1999
        %2004 = vst [vmem:[%s612 + $0x18] sm:$0xff] %v2000
        %v2005 = vpack.c.bf16 %v1997, %v1997
        %v2006 = vpack.c.bf16 %v1998, %v1998
        %v2007 = vpack.c.bf16 %v1999, %v1999
        %v2008 = vpack.c.bf16 %v2000, %v2000
        %v2009 = vld [vmem:[#allocation14] sm:$0xf]
        %v2010 = vld [vmem:[#allocation14 + $0x4] sm:$0xf]
        %v2011 = vld [vmem:[#allocation14 + $0x8] sm:$0xf]
        %v2012 = vld [vmem:[#allocation14 + $0xc] sm:$0xf]
        %v2013 = vld [vmem:[#allocation14 + $0x10] sm:$0xf]
        %v2014 = vld [vmem:[#allocation14 + $0x14] sm:$0xf]
        %v2015 = vld [vmem:[#allocation14 + $0x18] sm:$0xf]
        %v2016 = vld [vmem:[#allocation14 + $0x1c] sm:$0xf]
        %v2017 = vld [vmem:[#allocation14 + $0x20] sm:$0xf]
        %v2018 = vld [vmem:[#allocation14 + $0x24] sm:$0xf]
        %v2019 = vld [vmem:[#allocation14 + $0x28] sm:$0xf]
        %v2020 = vld [vmem:[#allocation14 + $0x2c] sm:$0xf]
        %v2021 = vld [vmem:[#allocation14 + $0x30] sm:$0xf]
        %v2022 = vld [vmem:[#allocation14 + $0x34] sm:$0xf]
        %v2023 = vld [vmem:[#allocation14 + $0x38] sm:$0xf]
        %v2024 = vld [vmem:[#allocation14 + $0x3c] sm:$0xf]
        %v2025 = vld [vmem:[#allocation14 + $0x40] sm:$0xf]
        %v2026 = vld [vmem:[#allocation14 + $0x44] sm:$0xf]
        %v2027 = vld [vmem:[#allocation14 + $0x48] sm:$0xf]
        %v2028 = vld [vmem:[#allocation14 + $0x4c] sm:$0xf]
        %v2029 = vld [vmem:[#allocation14 + $0x50] sm:$0xf]
        %v2030 = vld [vmem:[#allocation14 + $0x54] sm:$0xf]
        %v2031 = vld [vmem:[#allocation14 + $0x58] sm:$0xf]
        %v2032 = vld [vmem:[#allocation14 + $0x5c] sm:$0xf]
        %v2033 = vld [vmem:[#allocation14 + $0x60] sm:$0xf]
        %v2034 = vld [vmem:[#allocation14 + $0x64] sm:$0xf]
        %v2035 = vld [vmem:[#allocation14 + $0x68] sm:$0xf]
        %v2036 = vld [vmem:[#allocation14 + $0x6c] sm:$0xf]
        %v2037 = vld [vmem:[#allocation14 + $0x70] sm:$0xf]
        %v2038 = vld [vmem:[#allocation14 + $0x74] sm:$0xf]
        %v2039 = vld [vmem:[#allocation14 + $0x78] sm:$0xf]
        %v2040 = vld [vmem:[#allocation14 + $0x7c] sm:$0xf]
        %v2041 = vld [vmem:[#allocation14 + $0x80] sm:$0xf]
        %v2042 = vld [vmem:[#allocation14 + $0x84] sm:$0xf]
        %v2043 = vld [vmem:[#allocation14 + $0x88] sm:$0xf]
        %v2044 = vld [vmem:[#allocation14 + $0x8c] sm:$0xf]
        %v2045 = vld [vmem:[#allocation14 + $0x90] sm:$0xf]
        %v2046 = vld [vmem:[#allocation14 + $0x94] sm:$0xf]
        %v2047 = vld [vmem:[#allocation14 + $0x98] sm:$0xf]
        %v2048 = vld [vmem:[#allocation14 + $0x9c] sm:$0xf]
        %v2049 = vld [vmem:[#allocation14 + $0xa0] sm:$0xf]
        %v2050 = vld [vmem:[#allocation14 + $0xa4] sm:$0xf]
        %v2051 = vld [vmem:[#allocation14 + $0xa8] sm:$0xf]
        %v2052 = vld [vmem:[#allocation14 + $0xac] sm:$0xf]
        %v2053 = vld [vmem:[#allocation14 + $0xb0] sm:$0xf]
        %v2054 = vld [vmem:[#allocation14 + $0xb4] sm:$0xf]
        %v2055 = vld [vmem:[#allocation14 + $0xb8] sm:$0xf]
        %v2056 = vld [vmem:[#allocation14 + $0xbc] sm:$0xf]
        %v2057 = vld [vmem:[#allocation14 + $0xc0] sm:$0xf]
        %v2058 = vld [vmem:[#allocation14 + $0xc4] sm:$0xf]
        %v2059 = vld [vmem:[#allocation14 + $0xc8] sm:$0xf]
        %v2060 = vld [vmem:[#allocation14 + $0xcc] sm:$0xf]
        %v2061 = vld [vmem:[#allocation14 + $0xd0] sm:$0xf]
        %v2062 = vld [vmem:[#allocation14 + $0xd4] sm:$0xf]
        %v2063 = vld [vmem:[#allocation14 + $0xd8] sm:$0xf]
        %v2064 = vld [vmem:[#allocation14 + $0xdc] sm:$0xf]
        %v2065 = vld [vmem:[#allocation14 + $0xe0] sm:$0xf]
        %v2066 = vld [vmem:[#allocation14 + $0xe4] sm:$0xf]
        %v2067 = vld [vmem:[#allocation14 + $0xe8] sm:$0xf]
        %v2068 = vld [vmem:[#allocation14 + $0xec] sm:$0xf]
        %v2069 = vld [vmem:[#allocation14 + $0xf0] sm:$0xf]
        %v2070 = vld [vmem:[#allocation14 + $0xf4] sm:$0xf]
        %v2071 = vld [vmem:[#allocation14 + $0xf8] sm:$0xf]
        %v2072 = vld [vmem:[#allocation14 + $0xfc] sm:$0xf]
        %v2073 = vld [vmem:[%s12] sm:$0x1]
        %v2075 = vlaneseq
        %v2076 = vshrl.u32 %v2075, 7
        %v2077 = vsub.s32 0, %v2076
        %v2078 = vrot.slane %v2073, %v2077
        %v2144 = vunpack.c.l.b16 %v2009
        %v2145 = vunpack.c.l.b16 %v2010
        %v2146 = vunpack.c.l.b16 %v2011
        %v2147 = vunpack.c.l.b16 %v2012
        %v2148 = vunpack.c.l.b16 %v2013
        %v2149 = vunpack.c.l.b16 %v2014
        %v2150 = vunpack.c.l.b16 %v2015
        %v2151 = vunpack.c.l.b16 %v2016
        %v2152 = vunpack.c.l.b16 %v2017
        %v2153 = vunpack.c.l.b16 %v2018
        %v2154 = vunpack.c.l.b16 %v2019
        %v2155 = vunpack.c.l.b16 %v2020
        %v2156 = vunpack.c.l.b16 %v2021
        %v2157 = vunpack.c.l.b16 %v2022
        %v2158 = vunpack.c.l.b16 %v2023
        %v2159 = vunpack.c.l.b16 %v2024
        %v2160 = vunpack.c.l.b16 %v2025
        %v2161 = vunpack.c.l.b16 %v2026
        %v2162 = vunpack.c.l.b16 %v2027
        %v2163 = vunpack.c.l.b16 %v2028
        %v2164 = vunpack.c.l.b16 %v2029
        %v2165 = vunpack.c.l.b16 %v2030
        %v2166 = vunpack.c.l.b16 %v2031
        %v2167 = vunpack.c.l.b16 %v2032
        %v2168 = vunpack.c.l.b16 %v2033
        %v2169 = vunpack.c.l.b16 %v2034
        %v2170 = vunpack.c.l.b16 %v2035
        %v2171 = vunpack.c.l.b16 %v2036
        %v2172 = vunpack.c.l.b16 %v2037
        %v2173 = vunpack.c.l.b16 %v2038
        %v2174 = vunpack.c.l.b16 %v2039
        %v2175 = vunpack.c.l.b16 %v2040
        %v2176 = vunpack.c.l.b16 %v2041
        %v2177 = vunpack.c.l.b16 %v2042
        %v2178 = vunpack.c.l.b16 %v2043
        %v2179 = vunpack.c.l.b16 %v2044
        %v2180 = vunpack.c.l.b16 %v2045
        %v2181 = vunpack.c.l.b16 %v2046
        %v2182 = vunpack.c.l.b16 %v2047
        %v2183 = vunpack.c.l.b16 %v2048
        %v2184 = vunpack.c.l.b16 %v2049
        %v2185 = vunpack.c.l.b16 %v2050
        %v2186 = vunpack.c.l.b16 %v2051
        %v2187 = vunpack.c.l.b16 %v2052
        %v2188 = vunpack.c.l.b16 %v2053
        %v2189 = vunpack.c.l.b16 %v2054
        %v2190 = vunpack.c.l.b16 %v2055
        %v2191 = vunpack.c.l.b16 %v2056
        %v2192 = vunpack.c.l.b16 %v2057
        %v2193 = vunpack.c.l.b16 %v2058
        %v2194 = vunpack.c.l.b16 %v2059
        %v2195 = vunpack.c.l.b16 %v2060
        %v2196 = vunpack.c.l.b16 %v2061
        %v2197 = vunpack.c.l.b16 %v2062
        %v2198 = vunpack.c.l.b16 %v2063
        %v2199 = vunpack.c.l.b16 %v2064
        %v2200 = vunpack.c.l.b16 %v2065
        %v2201 = vunpack.c.l.b16 %v2066
        %v2202 = vunpack.c.l.b16 %v2067
        %v2203 = vunpack.c.l.b16 %v2068
        %v2204 = vunpack.c.l.b16 %v2069
        %v2205 = vunpack.c.l.b16 %v2070
        %v2206 = vunpack.c.l.b16 %v2071
        %v2207 = vunpack.c.l.b16 %v2072
        %v2208 = vpack.c.b16 %v2145, %v2144
        %v2209 = vpack.c.b16 %v2147, %v2146
        %v2210 = vpack.c.b16 %v2149, %v2148
        %v2211 = vpack.c.b16 %v2151, %v2150
        %v2212 = vpack.c.b16 %v2153, %v2152
        %v2213 = vpack.c.b16 %v2155, %v2154
        %v2214 = vpack.c.b16 %v2157, %v2156
        %v2215 = vpack.c.b16 %v2159, %v2158
        %v2216 = vpack.c.b16 %v2161, %v2160
        %v2217 = vpack.c.b16 %v2163, %v2162
        %v2218 = vpack.c.b16 %v2165, %v2164
        %v2219 = vpack.c.b16 %v2167, %v2166
        %v2220 = vpack.c.b16 %v2169, %v2168
        %v2221 = vpack.c.b16 %v2171, %v2170
        %v2222 = vpack.c.b16 %v2173, %v2172
        %v2223 = vpack.c.b16 %v2175, %v2174
        %v2224 = vpack.c.b16 %v2177, %v2176
        %v2225 = vpack.c.b16 %v2179, %v2178
        %v2226 = vpack.c.b16 %v2181, %v2180
        %v2227 = vpack.c.b16 %v2183, %v2182
        %v2228 = vpack.c.b16 %v2185, %v2184
        %v2229 = vpack.c.b16 %v2187, %v2186
        %v2230 = vpack.c.b16 %v2189, %v2188
        %v2231 = vpack.c.b16 %v2191, %v2190
        %v2232 = vpack.c.b16 %v2193, %v2192
        %v2233 = vpack.c.b16 %v2195, %v2194
        %v2234 = vpack.c.b16 %v2197, %v2196
        %v2235 = vpack.c.b16 %v2199, %v2198
        %v2236 = vpack.c.b16 %v2201, %v2200
        %v2237 = vpack.c.b16 %v2203, %v2202
        %v2238 = vpack.c.b16 %v2205, %v2204
        %v2239 = vpack.c.b16 %v2207, %v2206
        %2272 = vmatprep.subr.bf16.mxu0 0
        %2273 = vmatpush1.bf16.msra.mxu0 %v2208
        %2274 = vmatprep.subr.bf16.mxu0 0
        %2275 = vmatpush1.bf16.msra.mxu0 %v2209
        %2276 = vmatprep.subr.bf16.mxu0 0
        %2277 = vmatpush1.bf16.msra.mxu0 %v2210
        %2278 = vmatprep.subr.bf16.mxu0 0
        %2279 = vmatpush1.bf16.msra.mxu0 %v2211
        %2280 = vmatprep.subr.bf16.mxu0 0
        %2281 = vmatpush1.bf16.msra.mxu0 %v2212
        %2282 = vmatprep.subr.bf16.mxu0 0
        %2283 = vmatpush1.bf16.msra.mxu0 %v2213
        %2284 = vmatprep.subr.bf16.mxu0 0
        %2285 = vmatpush1.bf16.msra.mxu0 %v2214
        %2286 = vmatprep.subr.bf16.mxu0 0
        %2287 = vmatpush1.bf16.msra.mxu0 %v2215
        %2288 = vmatprep.subr.bf16.mxu0 0
        %2289 = vmatpush1.bf16.msra.mxu0 %v2216
        %2290 = vmatprep.subr.bf16.mxu0 0
        %2291 = vmatpush1.bf16.msra.mxu0 %v2217
        %2292 = vmatprep.subr.bf16.mxu0 0
        %2293 = vmatpush1.bf16.msra.mxu0 %v2218
        %2294 = vmatprep.subr.bf16.mxu0 0
        %2295 = vmatpush1.bf16.msra.mxu0 %v2219
        %2296 = vmatprep.subr.bf16.mxu0 0
        %2297 = vmatpush1.bf16.msra.mxu0 %v2220
        %2298 = vmatprep.subr.bf16.mxu0 0
        %2299 = vmatpush1.bf16.msra.mxu0 %v2221
        %2300 = vmatprep.subr.bf16.mxu0 0
        %2301 = vmatpush1.bf16.msra.mxu0 %v2222
        %2302 = vmatprep.subr.bf16.mxu0 0
        %2303 = vmatpush1.bf16.msra.mxu0 %v2223
        %2304 = vmatprep.mubr.bf16.mxu0 %v2006
        %2305 = vmatmul.mubr.bf16.gmra.mrb[0].mxu0 %v2005
        %v2306 = vpop.f32.mrb[0].mxu0
        %v2307 = vadd.f32 %v2078, %v2306
        %v2308 = vpop.f32.mrb[0].mxu0
        %v2309 = vpop.f32.mrb[0].mxu0
        %v2310 = vpop.f32.mrb[0].mxu0
        %2311 = vdwg.mxu0
        %2312 = vmatprep.subr.bf16.mxu0 0
        %2313 = vmatpush1.bf16.msra.mxu0 %v2224
        %2314 = vmatprep.subr.bf16.mxu0 0
        %2315 = vmatpush1.bf16.msra.mxu0 %v2225
        %2316 = vmatprep.subr.bf16.mxu0 0
        %2317 = vmatpush1.bf16.msra.mxu0 %v2226
        %2318 = vmatprep.subr.bf16.mxu0 0
        %2319 = vmatpush1.bf16.msra.mxu0 %v2227
        %2320 = vmatprep.subr.bf16.mxu0 0
        %2321 = vmatpush1.bf16.msra.mxu0 %v2228
        %2322 = vmatprep.subr.bf16.mxu0 0
        %2323 = vmatpush1.bf16.msra.mxu0 %v2229
        %2324 = vmatprep.subr.bf16.mxu0 0
        %2325 = vmatpush1.bf16.msra.mxu0 %v2230
        %2326 = vmatprep.subr.bf16.mxu0 0
        %2327 = vmatpush1.bf16.msra.mxu0 %v2231
        %2328 = vmatprep.subr.bf16.mxu0 0
        %2329 = vmatpush1.bf16.msra.mxu0 %v2232
        %2330 = vmatprep.subr.bf16.mxu0 0
        %2331 = vmatpush1.bf16.msra.mxu0 %v2233
        %2332 = vmatprep.subr.bf16.mxu0 0
        %2333 = vmatpush1.bf16.msra.mxu0 %v2234
        %2334 = vmatprep.subr.bf16.mxu0 0
        %2335 = vmatpush1.bf16.msra.mxu0 %v2235
        %2336 = vmatprep.subr.bf16.mxu0 0
        %2337 = vmatpush1.bf16.msra.mxu0 %v2236
        %2338 = vmatprep.subr.bf16.mxu0 0
        %2339 = vmatpush1.bf16.msra.mxu0 %v2237
        %2340 = vmatprep.subr.bf16.mxu0 0
        %2341 = vmatpush1.bf16.msra.mxu0 %v2238
        %2342 = vmatprep.subr.bf16.mxu0 0
        %2343 = vmatpush1.bf16.msra.mxu0 %v2239
        %2344 = vmatprep.mubr.bf16.mxu0 %v2008
        %2345 = vmatmul.mubr.bf16.gmra.mrb[0].mxu0 %v2007
        %v2346 = vpop.f32.mrb[0].mxu0
        %v2347 = vadd.f32 %v2307, %v2346
        %v2348 = vpop.f32.mrb[0].mxu0
        %v2349 = vpop.f32.mrb[0].mxu0
        %v2350 = vpop.f32.mrb[0].mxu0
        %2351 = vdwg.mxu0
        %2352 = vst [vmem:[%s605] sm:$0xff] %v2347
        %s2353 = sand.u32 %s347, 1
        %s2354 = scalar_lea.sflag [#allocation7], %s2353
        %s2355 = sand.u32 %s347, 1
        %s2356 = smul.addr %s2355, 8
        %s2357 = scalar_lea.vmem [#allocation16], %s2356
        %s2358 = sand.u32 %s375, 1
        %s2359 = scalar_lea.sflag [#allocation18], %s2358
        %s2360 = sand.u32 %s375, 1
        %s2361 = smul.addr %s2360, 32
        %s2362 = scalar_lea.vmem [#allocation17], %s2361
        // Predicated region
        $region101: #{tpu_custom_call.1} parent=71 // pred_check
          %p2363 = pneg %p357
        $region102: #{tpu_custom_call.1} parent=71 // pred_check_branch
          %2365 = sbr.rel (%p2363) target = $region104
        $region103: #{tpu_custom_call.1} parent=71 // pred_region
          %s2367 = ssub.s32 128, 128
          %2368 = vsyncadd %s2354, %s2367
          %s2369 = smul.addr %s44, 2
          %s2370 = sadd.s32 %s45, %s2369
          %s2371 = smul.addr %s2370, 128
          %s2372 = scalar_lea.hbm %s13, %s2371
          %s2374 = sshll.u32 %s2357, 4
          %s2375 = int_to_ptr.vmem [resolvable:$true] %s2374
          %2377 = dma.vmem_to_hbm [thread:$0]  %s2375, 128, %s2372, %s2354
        $region104: #{tpu_custom_call.1} parent=71 // pred_fallthru
          _
        // Predicated region
        $region105: #{tpu_custom_call.1} parent=71 // pred_check
          %p2378 = pneg %p385
        $region106: #{tpu_custom_call.1} parent=71 // pred_check_branch
          %2380 = sbr.rel (%p2378) target = $region108
        $region107: #{tpu_custom_call.1} parent=71 // pred_region
          %s2382 = ssub.s32 512, 512
          %2383 = vsyncadd %s2359, %s2382
          %s2384 = smul.addr %s45, 4
          %s2385 = smul.addr %s44, 8
          %s2386 = sadd.s32 %s2384, %s2385
          %s2387 = smul.addr %s2386, 128
          %s2388 = scalar_lea.hbm %s14, %s2387
          %s2390 = sshll.u32 %s2362, 4
          %s2391 = int_to_ptr.vmem [resolvable:$true] %s2390
          %2393 = dma.vmem_to_hbm [thread:$0]  %s2391, 512, %s2388, %s2359
        $region108: #{tpu_custom_call.1} parent=71 // pred_fallthru
          _
      $region72: #{tpu_custom_call.1} parent=5 // pred_fallthru
        _
      %p2394 = scmp.le.s32.totalorder 2, %s35
      // Predicated region
      $region109: #{tpu_custom_call.1} parent=5 // pred_check
        %p2395 = pneg %p2394
      $region110: #{tpu_custom_call.1} parent=5 // pred_check_branch
        %2397 = sbr.rel (%p2395) target = $region112
      $region111: #{tpu_custom_call.1} parent=5 // pred_region
        %s2398 = ssub.s32 %s35, 2
        // Predicated region
        $region113: #{tpu_custom_call.1} parent=111 // pred_check
          %p2399 = pneg %p363
        $region114: #{tpu_custom_call.1} parent=111 // pred_check_branch
          %2401 = sbr.rel (%p2399) target = $region116
        $region115: #{tpu_custom_call.1} parent=111 // pred_region
          %s2402 = sand.u32 %s348, 1
          %s2403 = scalar_lea.sflag [#allocation7], %s2402
          %s2404 = sand.u32 %s348, 1
          %s2405 = smul.addr %s2404, 8
          %s2406 = scalar_lea.vmem [#allocation16], %s2405
          %2407 = dma.done %s2403, 128
        $region116: #{tpu_custom_call.1} parent=111 // pred_fallthru
          _
        // Predicated region
        $region117: #{tpu_custom_call.1} parent=111 // pred_check
          %p2408 = pneg %p391
        $region118: #{tpu_custom_call.1} parent=111 // pred_check_branch
          %2410 = sbr.rel (%p2408) target = $region120
        $region119: #{tpu_custom_call.1} parent=111 // pred_region
          %s2411 = sand.u32 %s376, 1
          %s2412 = scalar_lea.sflag [#allocation18], %s2411
          %s2413 = sand.u32 %s376, 1
          %s2414 = smul.addr %s2413, 32
          %s2415 = scalar_lea.vmem [#allocation17], %s2414
          %2416 = dma.done %s2412, 512
        $region120: #{tpu_custom_call.1} parent=111 // pred_fallthru
          _
      $region112: #{tpu_custom_call.1} parent=5 // pred_fallthru
        _
    $region6: #{tpu_custom_call.1} parent=1 // loop_footer
      %s39 = sadd.s32 1, %s35
    $region7: #{tpu_custom_call.1} parent=1 // loop_footer_branch
      %34 = sbr.rel target = $region3
    $region8: #{tpu_custom_call.1} parent=1 // loop_exit
      _
    %2417 = vsyncpa [#allocation6], 1
    %s2418 = scalar_lea.sflag [#allocation6], 1
    %2419 = vsyncpa %s2418, 1
    %2420 = vsyncpa [#allocation9], 1
    %s2421 = scalar_lea.sflag [#allocation9], 1
    %2422 = vsyncpa %s2421, 1
    %2423 = vsyncpa [#allocation12], 1
    %2424 = vsyncpa [#allocation15], 1
    %2425 = vsyncpa [#allocation7], 1
    %s2426 = scalar_lea.sflag [#allocation7], 1
    %2427 = vsyncpa %s2426, 1
    %2428 = vsyncpa [#allocation18], 1
    %s2429 = scalar_lea.sflag [#allocation18], 1
    %2430 = vsyncpa %s2429, 1

</llo_original>
